<compile_context>
chip_gen: v5e
topology: v5e:2x2
jax: 0.10.0
libtpu: 0.0.40
codegen_flags: <defaults>
</compile_context>

<pallas_src>
import functools
import math

import jax
import jax.numpy as jnp
from jax.experimental import pallas as pl
from jax.experimental.pallas import tpu as pltpu


# ----------------------------- Pallas kernel ---------------------------------

def _layer_norm(x, gamma, beta, eps=1e-5):
    # f32 math (PyTorch LayerNorm: biased variance, eps=1e-5)
    mu = jnp.mean(x, axis=-1, keepdims=True)
    var = jnp.mean(jnp.square(x - mu), axis=-1, keepdims=True)
    return (x - mu) * jax.lax.rsqrt(var + eps) * gamma + beta


def encoder_layer_kernel(
    # inputs
    x_ref,        # (bt*nq, d_model) f32  (flattened batch tile, q = k = v)
    bias_ref,     # (bt, nq, nq) f32      additive attention-mask bias
    # attention projection weights (pre-transposed, bf16) + biases (1, N) f32
    wq_ref, bq_ref, wk_ref, bk_ref, wv_ref, bv_ref, wo_ref, bo_ref,
    # layer-norm 1 (1, d_model) f32
    ln1g_ref, ln1b_ref,
    # feed-forward weights (pre-transposed, bf16) + biases (1, N) f32
    w1_ref, b1_ref, w2_ref, b2_ref,
    # layer-norm 2 (1, d_model) f32
    ln2g_ref, ln2b_ref,
    # output
    out_ref,      # (bt*nq, d_model)
    # scratch
    o_scr,        # (bt*nq, h*d_v) f32 VMEM: packed per-head attention outputs
    *, bt, nq, h, d_k, d_v,
):
    xf = x_ref[...]                       # (M, d_model) f32
    xb = xf.astype(jnp.bfloat16)

    # --- packed Q/K/V projections: full-K, bf16 operands, f32 accumulation ---
    # (1/sqrt(d_k) already folded into wq/bq wrapper-side.)
    q = jnp.dot(xb, wq_ref[...], preferred_element_type=jnp.float32) + bq_ref[...]
    k = jnp.dot(xb, wk_ref[...], preferred_element_type=jnp.float32) + bk_ref[...]
    v = jnp.dot(xb, wv_ref[...], preferred_element_type=jnp.float32) + bv_ref[...]

    bias = bias_ref[...]                  # (bt, nq, nq) f32

    if nq % 8 == 0:
        # --- batch-batched attention: one 3-D einsum pair per head.  The
        #     (bt*nq, C) -> (bt, nq, C) reshape only splits the major dim on a
        #     sublane-tile boundary (nq % 8 == 0), so it is a free relayout. ---
        qb = q.reshape(bt, nq, h * d_k).astype(jnp.bfloat16)
        kb = k.reshape(bt, nq, h * d_k).astype(jnp.bfloat16)
        vb = v.reshape(bt, nq, h * d_v).astype(jnp.bfloat16)
        for i in range(h):
            qh = qb[:, :, i * d_k:(i + 1) * d_k]            # (bt, nq, d_k)
            kh = kb[:, :, i * d_k:(i + 1) * d_k]            # (bt, nq, d_k)
            vh = vb[:, :, i * d_v:(i + 1) * d_v]            # (bt, nq, d_v)
            s = jnp.einsum('bqd,bkd->bqk', qh, kh,
                           preferred_element_type=jnp.float32) + bias
            m = jnp.max(s, axis=-1, keepdims=True)
            e = jnp.exp(s - m)
            p = e * pl.reciprocal(jnp.sum(e, axis=-1, keepdims=True), approx=True)
            oh = jnp.einsum('bqk,bkd->bqd', p.astype(jnp.bfloat16), vh,
                            preferred_element_type=jnp.float32)   # (bt, nq, d_v)
            o_scr[:, i * d_v:(i + 1) * d_v] = oh.reshape(bt * nq, d_v)
    else:
        # --- fallback: explicit per-(batch, head) loop (any nq) ---
        qb = q.astype(jnp.bfloat16)
        kb = k.astype(jnp.bfloat16)
        vb = v.astype(jnp.bfloat16)
        for b in range(bt):
            r0, r1 = b * nq, (b + 1) * nq
            bias_b = bias[b]              # (nq, nq)
            for i in range(h):
                qh = qb[r0:r1, i * d_k:(i + 1) * d_k]       # (nq, d_k)
                kh = kb[r0:r1, i * d_k:(i + 1) * d_k]       # (nq, d_k)
                vh = vb[r0:r1, i * d_v:(i + 1) * d_v]       # (nq, d_v)
                s = jnp.einsum('qd,kd->qk', qh, kh,
                               preferred_element_type=jnp.float32) + bias_b
                m = jnp.max(s, axis=-1, keepdims=True)
                e = jnp.exp(s - m)
                p = e * pl.reciprocal(jnp.sum(e, axis=-1, keepdims=True),
                                      approx=True)
                oh = jnp.einsum('qk,kd->qd', p.astype(jnp.bfloat16), vh,
                                preferred_element_type=jnp.float32)
                o_scr[r0:r1, i * d_v:(i + 1) * d_v] = oh

    # --- single full-K output projection ---
    o_all = o_scr[...].astype(jnp.bfloat16)                      # (M, h*d_v)
    o_proj = jnp.dot(o_all, wo_ref[...],
                     preferred_element_type=jnp.float32) + bo_ref[...]

    # --- residual + LayerNorm 1 (f32) ---
    y = _layer_norm(xf + o_proj, ln1g_ref[...], ln1b_ref[...])

    # --- position-wise feed forward (bf16 MXU, f32 accumulation) ---
    hdn = jnp.maximum(
        jnp.dot(y.astype(jnp.bfloat16), w1_ref[...],
                preferred_element_type=jnp.float32) + b1_ref[...], 0.0)
    ff = jnp.dot(hdn.astype(jnp.bfloat16), w2_ref[...],
                 preferred_element_type=jnp.float32) + b2_ref[...]

    # --- residual + LayerNorm 2 (f32) ---
    z = _layer_norm(y + ff, ln2g_ref[...], ln2b_ref[...])

    out_ref[...] = z.astype(out_ref.dtype)


# ------------------------------- wrappers --------------------------------------

def encoder_layer(x_flat, bias, kp, *, b_s, nq, h, d_k, d_v, bt):
    """One fused EncoderLayer forward. x_flat: (b_s*nq, d_model)."""
    M, d_model = x_flat.shape
    d_ff = kp["w1"].shape[1]
    n_tiles = b_s // bt

    row_spec = pl.BlockSpec((bt * nq, d_model), lambda g: (g, 0))
    bias_spec = pl.BlockSpec((bt, nq, nq), lambda g: (g, 0, 0))

    def full_spec(arr):
        nd = arr.ndim
        return pl.BlockSpec(arr.shape, lambda g, nd=nd: (0,) * nd)

    weight_order = ["wq", "bq", "wk", "bk", "wv", "bv", "wo", "bo",
                    "ln1_g", "ln1_b", "w1", "b1", "w2", "b2", "ln2_g", "ln2_b"]
    weight_args = [kp[name] for name in weight_order]

    kernel = functools.partial(encoder_layer_kernel,
                               bt=bt, nq=nq, h=h, d_k=d_k, d_v=d_v)

    dk_tot, dv_tot = h * d_k, h * d_v
    flops = int(
        2 * M * d_model * (2 * dk_tot + dv_tot)        # q/k/v projections
        + 2 * b_s * h * nq * nq * (d_k + d_v)          # QK^T + PV
        + 2 * M * dv_tot * d_model                     # output projection
        + 4 * M * d_model * d_ff)                      # FFN
    transcendentals = int(b_s * h * nq * nq + 4 * M)
    bytes_accessed = int(
        2 * M * d_model * 4                            # x in + out (f32)
        + b_s * nq * nq * 4                            # mask bias
        + 2 * (d_model * (2 * dk_tot + dv_tot)         # bf16 weights
               + dv_tot * d_model + 2 * d_model * d_ff)
        + 4 * (2 * dk_tot + dv_tot + 5 * d_model + d_ff))  # biases / LN params

    return pl.pallas_call(
        kernel,
        out_shape=jax.ShapeDtypeStruct((M, d_model), x_flat.dtype),
        grid_spec=pltpu.PrefetchScalarGridSpec(
            num_scalar_prefetch=0,
            grid=(n_tiles,),
            in_specs=[row_spec, bias_spec] + [full_spec(w) for w in weight_args],
            out_specs=pl.BlockSpec((bt * nq, d_model), lambda g: (g, 0)),
            scratch_shapes=[pltpu.VMEM((bt * nq, h * d_v), jnp.float32)],
        ),
        # each layer overwrites its (dead) input buffer -> no extra HBM alloc
        input_output_aliases={0: 0},
        compiler_params=pltpu.CompilerParams(
            dimension_semantics=("parallel",),
            vmem_limit_bytes=48 * 1024 * 1024),
        cost_estimate=pl.CostEstimate(flops=flops,
                                      transcendentals=transcendentals,
                                      bytes_accessed=bytes_accessed),
    )(x_flat, bias, *weight_args)


def _mask_to_bias(attention_mask, b_s, nq):
    """Convert boolean mask (True = masked) to additive f32 bias (b_s, nq, nq)."""
    if attention_mask is None:
        return jnp.zeros((b_s, nq, nq), jnp.float32)
    m = attention_mask
    if m.ndim == 4:
        m = m[:, 0]                      # drop (size-1) head axis
    m = jnp.broadcast_to(m, (b_s, nq, nq))
    return jnp.where(m, -1e9, 0.0).astype(jnp.float32)


def prep_kernel_params(p, d_k):
    """Cast matmul weights to bf16, fold 1/sqrt(d_k) into wq/bq, (1,N) biases."""
    scale = 1.0 / math.sqrt(d_k)
    row = lambda v: v.reshape(1, -1).astype(jnp.float32)
    return {
        "wq": (p["wq"] * scale).astype(jnp.bfloat16), "bq": row(p["bq"] * scale),
        "wk": p["wk"].astype(jnp.bfloat16), "bk": row(p["bk"]),
        "wv": p["wv"].astype(jnp.bfloat16), "bv": row(p["bv"]),
        "wo": p["wo"].astype(jnp.bfloat16), "bo": row(p["bo"]),
        "ln1_g": row(p["ln1_g"]), "ln1_b": row(p["ln1_b"]),
        "w1": p["w1"].astype(jnp.bfloat16), "b1": row(p["b1"]),
        "w2": p["w2"].astype(jnp.bfloat16), "b2": row(p["b2"]),
        "ln2_g": row(p["ln2_g"]), "ln2_b": row(p["ln2_b"]),
    }


@functools.partial(jax.jit, static_argnames=("h", "d_k", "d_v", "bt"))
def multi_level_encoder(x, attention_mask, layer_params, *, h, d_k, d_v, bt=None):
    """MultiLevelEncoder.forward: out = input; for l in layers: out = l(out,out,out,mask)."""
    b_s, nq, d_model = x.shape
    if bt is None:
        bt = b_s                          # whole (small) batch per grid step
    assert b_s % bt == 0
    bias = _mask_to_bias(attention_mask, b_s, nq)
    out = x.reshape(b_s * nq, d_model)    # lane-friendly flattened layout
    for p in layer_params:
        kp = prep_kernel_params(p, d_k)
        out = encoder_layer(out, bias, kp,
                            b_s=b_s, nq=nq, h=h, d_k=d_k, d_v=d_v, bt=bt)
    return out.reshape(b_s, nq, d_model)


# --------------------------- param init (deterministic) -----------------------

def xavier_uniform(key, shape):
    fan_out, fan_in = shape  # PyTorch Linear weight is (out, in)
    bound = math.sqrt(6.0 / (fan_in + fan_out))
    return jax.random.uniform(key, shape, jnp.float32, -bound, bound)


def make_params(key, d_model, d_k, d_v, h, d_ff):
    ks = jax.random.split(key, 8)
    wq = xavier_uniform(ks[0], (h * d_k, d_model))
    wk = xavier_uniform(ks[1], (h * d_k, d_model))
    wv = xavier_uniform(ks[2], (h * d_v, d_model))
    wo = xavier_uniform(ks[3], (d_model, h * d_v))
    b1lim = 1.0 / math.sqrt(d_model)
    b2lim = 1.0 / math.sqrt(d_ff)
    w1 = jax.random.uniform(ks[4], (d_ff, d_model), jnp.float32, -b1lim, b1lim)
    b1 = jax.random.uniform(ks[5], (d_ff,), jnp.float32, -b1lim, b1lim)
    w2 = jax.random.uniform(ks[6], (d_model, d_ff), jnp.float32, -b2lim, b2lim)
    b2 = jax.random.uniform(ks[7], (d_model,), jnp.float32, -b2lim, b2lim)
    return {
        # Linear weights pre-transposed to (in, out); math layout, f32
        "wq": wq.T, "bq": jnp.zeros((h * d_k,), jnp.float32),
        "wk": wk.T, "bk": jnp.zeros((h * d_k,), jnp.float32),
        "wv": wv.T, "bv": jnp.zeros((h * d_v,), jnp.float32),
        "wo": wo.T, "bo": jnp.zeros((d_model,), jnp.float32),
        "ln1_g": jnp.ones((d_model,), jnp.float32),
        "ln1_b": jnp.zeros((d_model,), jnp.float32),
        "w1": w1.T, "b1": b1,
        "w2": w2.T, "b2": b2,
        "ln2_g": jnp.ones((d_model,), jnp.float32),
        "ln2_b": jnp.zeros((d_model,), jnp.float32),
    }


# --------------------------- pure-JAX reference --------------------------------

def _reference_layer(x, p, mask, *, h, d_k, d_v):
    b_s, nq, d_model = x.shape
    q = (x @ p["wq"] + p["bq"]).reshape(b_s, nq, h, d_k).transpose(0, 2, 1, 3)
    k = (x @ p["wk"] + p["bk"]).reshape(b_s, nq, h, d_k).transpose(0, 2, 3, 1)
    v = (x @ p["wv"] + p["bv"]).reshape(b_s, nq, h, d_v).transpose(0, 2, 1, 3)
    att = jnp.matmul(q, k) / math.sqrt(d_k)
    if mask is not None:
        att = jnp.where(mask, -1e9, att)
    att = jax.nn.softmax(att, axis=-1)
    out = jnp.matmul(att, v).transpose(0, 2, 1, 3).reshape(b_s, nq, h * d_v)
    out = out @ p["wo"] + p["bo"]

    def ln(t, g, b):
        mu = jnp.mean(t, -1, keepdims=True)
        var = jnp.mean((t - mu) ** 2, -1, keepdims=True)
        return (t - mu) * jax.lax.rsqrt(var + 1e-5) * g + b

    y = ln(x + out, p["ln1_g"], p["ln1_b"])
    ff = jnp.maximum(y @ p["w1"] + p["b1"], 0.0) @ p["w2"] + p["b2"]
    return ln(y + ff, p["ln2_g"], p["ln2_b"])


def reference(x, mask, layer_params, *, h, d_k, d_v):
    out = x
    for p in layer_params:
        out = _reference_layer(out, p, mask, h=h, d_k=d_k, d_v=d_v)
    return out


# ----------------------------------- main --------------------------------------

if __name__ == "__main__":
    N_layers = 2
    d_model, d_k, d_v, h, d_ff = 32, 8, 8, 4, 64
    b_s, seq = 2, 8

    key = jax.random.PRNGKey(0)
    kx, kp = jax.random.split(key)
    x = jax.random.normal(kx, (b_s, seq, d_model), jnp.float32)
    layer_keys = jax.random.split(kp, N_layers)
    layer_params = [make_params(k, d_model, d_k, d_v, h, d_ff) for k in layer_keys]

    # key-padding style mask (True = masked): last key of batch element 1
    attention_mask = jnp.zeros((b_s, 1, 1, seq), dtype=bool).at[1, 0, 0, seq - 1].set(True)

    out = multi_level_encoder(x, attention_mask, layer_params, h=h, d_k=d_k, d_v=d_v)
    out = jax.block_until_ready(out)

    ref = reference(x, attention_mask, layer_params, h=h, d_k=d_k, d_v=d_v)
    assert out.shape == (b_s, seq, d_model)
    max_err = float(jnp.max(jnp.abs(out - ref)))
    # bf16 MXU operands + approx reciprocal -> loosened tolerance vs f32 reference
    assert jnp.allclose(out, ref, atol=3e-2, rtol=3e-2), \
        f"mismatch vs JAX reference (max abs err {max_err})"

    print("KERNEL_OK")
</pallas_src>

<mosaic_0001>
module attributes {stable_mosaic.version = 11 : i64} {
  func.func @encoder_layer_kernel(%arg0: i32, %arg1: memref<16x32xf32, #tpu.memory_space<vmem>>, %arg2: memref<2x8x8xf32, #tpu.memory_space<vmem>>, %arg3: memref<32x32xbf16, #tpu.memory_space<vmem>>, %arg4: memref<1x32xf32, #tpu.memory_space<vmem>>, %arg5: memref<32x32xbf16, #tpu.memory_space<vmem>>, %arg6: memref<1x32xf32, #tpu.memory_space<vmem>>, %arg7: memref<32x32xbf16, #tpu.memory_space<vmem>>, %arg8: memref<1x32xf32, #tpu.memory_space<vmem>>, %arg9: memref<32x32xbf16, #tpu.memory_space<vmem>>, %arg10: memref<1x32xf32, #tpu.memory_space<vmem>>, %arg11: memref<1x32xf32, #tpu.memory_space<vmem>>, %arg12: memref<1x32xf32, #tpu.memory_space<vmem>>, %arg13: memref<32x64xbf16, #tpu.memory_space<vmem>>, %arg14: memref<1x64xf32, #tpu.memory_space<vmem>>, %arg15: memref<64x32xbf16, #tpu.memory_space<vmem>>, %arg16: memref<1x32xf32, #tpu.memory_space<vmem>>, %arg17: memref<1x32xf32, #tpu.memory_space<vmem>>, %arg18: memref<1x32xf32, #tpu.memory_space<vmem>>, %arg19: memref<16x32xf32, #tpu.memory_space<vmem>>, %arg20: memref<16x32xf32, #tpu.memory_space<vmem>>) attributes {dimension_semantics = [#tpu.dimension_semantics<parallel>], iteration_bounds = array<i64: 1>, scalar_prefetch = 0 : i64, scratch_operands = 1 : i64, tpu.core_type = #tpu.core_type<tc>, window_params = [{transform_indices = @transform_0, window_bounds = array<i64: 16, 32>}, {transform_indices = @transform_1, window_bounds = array<i64: 2, 8, 8>}, {pipeline_mode = #tpu.pipeline_mode<synchronous>, transform_indices = @transform_2, window_bounds = array<i64: 32, 32>}, {pipeline_mode = #tpu.pipeline_mode<synchronous>, transform_indices = @transform_3, window_bounds = array<i64: 1, 32>}, {pipeline_mode = #tpu.pipeline_mode<synchronous>, transform_indices = @transform_4, window_bounds = array<i64: 32, 32>}, {pipeline_mode = #tpu.pipeline_mode<synchronous>, transform_indices = @transform_5, window_bounds = array<i64: 1, 32>}, {pipeline_mode = #tpu.pipeline_mode<synchronous>, transform_indices = @transform_6, window_bounds = array<i64: 32, 32>}, {pipeline_mode = #tpu.pipeline_mode<synchronous>, transform_indices = @transform_7, window_bounds = array<i64: 1, 32>}, {pipeline_mode = #tpu.pipeline_mode<synchronous>, transform_indices = @transform_8, window_bounds = array<i64: 32, 32>}, {pipeline_mode = #tpu.pipeline_mode<synchronous>, transform_indices = @transform_9, window_bounds = array<i64: 1, 32>}, {pipeline_mode = #tpu.pipeline_mode<synchronous>, transform_indices = @transform_10, window_bounds = array<i64: 1, 32>}, {pipeline_mode = #tpu.pipeline_mode<synchronous>, transform_indices = @transform_11, window_bounds = array<i64: 1, 32>}, {pipeline_mode = #tpu.pipeline_mode<synchronous>, transform_indices = @transform_12, window_bounds = array<i64: 32, 64>}, {pipeline_mode = #tpu.pipeline_mode<synchronous>, transform_indices = @transform_13, window_bounds = array<i64: 1, 64>}, {pipeline_mode = #tpu.pipeline_mode<synchronous>, transform_indices = @transform_14, window_bounds = array<i64: 64, 32>}, {pipeline_mode = #tpu.pipeline_mode<synchronous>, transform_indices = @transform_15, window_bounds = array<i64: 1, 32>}, {pipeline_mode = #tpu.pipeline_mode<synchronous>, transform_indices = @transform_16, window_bounds = array<i64: 1, 32>}, {pipeline_mode = #tpu.pipeline_mode<synchronous>, transform_indices = @transform_17, window_bounds = array<i64: 1, 32>}, {transform_indices = @transform_18, window_bounds = array<i64: 16, 32>}]} {
    %c0 = arith.constant 0 : index
    %c0_0 = arith.constant 0 : index
    %0 = vector.load %arg1[%c0, %c0_0] : memref<16x32xf32, #tpu.memory_space<vmem>>, vector<16x32xf32>
    %1 = arith.truncf %0 : vector<16x32xf32> to vector<16x32xbf16>
    %c0_1 = arith.constant 0 : index
    %c0_2 = arith.constant 0 : index
    %2 = vector.load %arg3[%c0_1, %c0_2] : memref<32x32xbf16, #tpu.memory_space<vmem>>, vector<32x32xbf16>
    %cst = arith.constant dense<0.000000e+00> : vector<16x32xf32>
    %3 = tpu.matmul %1, %2, %cst {dimension_numbers = #tpu.dot_dimension_numbers<[1], [0], [0], [1], [0, 0, 1, 1], [], []>} : vector<16x32xbf16>, vector<32x32xbf16>, vector<16x32xf32> -> vector<16x32xf32>
    %c0_3 = arith.constant 0 : index
    %c0_4 = arith.constant 0 : index
    %4 = vector.load %arg4[%c0_3, %c0_4] : memref<1x32xf32, #tpu.memory_space<vmem>>, vector<1x32xf32>
    %5 = vector.broadcast %4 : vector<1x32xf32> to vector<16x32xf32>
    %6 = arith.addf %3, %5 : vector<16x32xf32>
    %c0_5 = arith.constant 0 : index
    %c0_6 = arith.constant 0 : index
    %7 = vector.load %arg5[%c0_5, %c0_6] : memref<32x32xbf16, #tpu.memory_space<vmem>>, vector<32x32xbf16>
    %cst_7 = arith.constant dense<0.000000e+00> : vector<16x32xf32>
    %8 = tpu.matmul %1, %7, %cst_7 {dimension_numbers = #tpu.dot_dimension_numbers<[1], [0], [0], [1], [0, 0, 1, 1], [], []>} : vector<16x32xbf16>, vector<32x32xbf16>, vector<16x32xf32> -> vector<16x32xf32>
    %c0_8 = arith.constant 0 : index
    %c0_9 = arith.constant 0 : index
    %9 = vector.load %arg6[%c0_8, %c0_9] : memref<1x32xf32, #tpu.memory_space<vmem>>, vector<1x32xf32>
    %10 = vector.broadcast %9 : vector<1x32xf32> to vector<16x32xf32>
    %11 = arith.addf %8, %10 : vector<16x32xf32>
    %c0_10 = arith.constant 0 : index
    %c0_11 = arith.constant 0 : index
    %12 = vector.load %arg7[%c0_10, %c0_11] : memref<32x32xbf16, #tpu.memory_space<vmem>>, vector<32x32xbf16>
    %cst_12 = arith.constant dense<0.000000e+00> : vector<16x32xf32>
    %13 = tpu.matmul %1, %12, %cst_12 {dimension_numbers = #tpu.dot_dimension_numbers<[1], [0], [0], [1], [0, 0, 1, 1], [], []>} : vector<16x32xbf16>, vector<32x32xbf16>, vector<16x32xf32> -> vector<16x32xf32>
    %c0_13 = arith.constant 0 : index
    %c0_14 = arith.constant 0 : index
    %14 = vector.load %arg8[%c0_13, %c0_14] : memref<1x32xf32, #tpu.memory_space<vmem>>, vector<1x32xf32>
    %15 = vector.broadcast %14 : vector<1x32xf32> to vector<16x32xf32>
    %16 = arith.addf %13, %15 : vector<16x32xf32>
    %c0_15 = arith.constant 0 : index
    %c0_16 = arith.constant 0 : index
    %c0_17 = arith.constant 0 : index
    %17 = vector.load %arg2[%c0_15, %c0_16, %c0_17] : memref<2x8x8xf32, #tpu.memory_space<vmem>>, vector<2x8x8xf32>
    %18 = vector.shape_cast %6 : vector<16x32xf32> to vector<2x8x32xf32>
    %19 = arith.truncf %18 : vector<2x8x32xf32> to vector<2x8x32xbf16>
    %20 = vector.shape_cast %11 : vector<16x32xf32> to vector<2x8x32xf32>
    %21 = arith.truncf %20 : vector<2x8x32xf32> to vector<2x8x32xbf16>
    %22 = vector.shape_cast %16 : vector<16x32xf32> to vector<2x8x32xf32>
    %23 = arith.truncf %22 : vector<2x8x32xf32> to vector<2x8x32xbf16>
    %24 = vector.extract_strided_slice %19 {offsets = [0, 0, 0], sizes = [2, 8, 8], strides = [1, 1, 1]} : vector<2x8x32xbf16> to vector<2x8x8xbf16>
    %25 = vector.extract_strided_slice %21 {offsets = [0, 0, 0], sizes = [2, 8, 8], strides = [1, 1, 1]} : vector<2x8x32xbf16> to vector<2x8x8xbf16>
    %26 = vector.extract_strided_slice %23 {offsets = [0, 0, 0], sizes = [2, 8, 8], strides = [1, 1, 1]} : vector<2x8x32xbf16> to vector<2x8x8xbf16>
    "tpu.trace_start"() <{level = 10 : i32, message = "bqd,bkd->bqk"}> : () -> ()
    %cst_18 = arith.constant dense<0.000000e+00> : vector<2x8x8xf32>
    %27 = tpu.matmul %24, %25, %cst_18 {dimension_numbers = #tpu.dot_dimension_numbers<[2], [2], [1], [1], [0, 0, 0, 1, 1, 1], [0], [0]>} : vector<2x8x8xbf16>, vector<2x8x8xbf16>, vector<2x8x8xf32> -> vector<2x8x8xf32>
    "tpu.trace_stop"() : () -> ()
    %28 = arith.addf %27, %17 : vector<2x8x8xf32>
    %cst_19 = arith.constant dense<0xFF800000> : vector<2x8xf32>
    %29 = vector.multi_reduction <maximumf>, %28, %cst_19 [2] : vector<2x8x8xf32> to vector<2x8xf32>
    %30 = vector.shape_cast %29 : vector<2x8xf32> to vector<2x8x1xf32>
    %31 = vector.broadcast %30 : vector<2x8x1xf32> to vector<2x8x8xf32>
    %32 = arith.subf %28, %31 : vector<2x8x8xf32>
    %33 = math.exp %32 : vector<2x8x8xf32>
    %cst_20 = arith.constant dense<0.000000e+00> : vector<2x8xf32>
    %34 = vector.multi_reduction <add>, %33, %cst_20 [2] : vector<2x8x8xf32> to vector<2x8xf32>
    %35 = vector.shape_cast %34 : vector<2x8xf32> to vector<2x8x1xf32>
    %36 = tpu.reciprocal %35 {approx = true} : vector<2x8x1xf32> -> vector<2x8x1xf32>
    %37 = vector.broadcast %36 : vector<2x8x1xf32> to vector<2x8x8xf32>
    %38 = arith.mulf %33, %37 : vector<2x8x8xf32>
    %39 = arith.truncf %38 : vector<2x8x8xf32> to vector<2x8x8xbf16>
    "tpu.trace_start"() <{level = 10 : i32, message = "bqk,bkd->bqd"}> : () -> ()
    %cst_21 = arith.constant dense<0.000000e+00> : vector<2x8x8xf32>
    %40 = tpu.matmul %39, %26, %cst_21 {dimension_numbers = #tpu.dot_dimension_numbers<[2], [1], [1], [2], [0, 0, 0, 1, 1, 2], [0], [0]>} : vector<2x8x8xbf16>, vector<2x8x8xbf16>, vector<2x8x8xf32> -> vector<2x8x8xf32>
    "tpu.trace_stop"() : () -> ()
    %41 = vector.shape_cast %40 : vector<2x8x8xf32> to vector<16x8xf32>
    %c0_22 = arith.constant 0 : index
    %c0_23 = arith.constant 0 : index
    %42 = vector.load %arg20[%c0_22, %c0_23] : memref<16x32xf32, #tpu.memory_space<vmem>>, vector<16x8xf32>
    tpu.vector_store %arg20[%c0_22, %c0_23], %41 {strides = array<i32>} : memref<16x32xf32, #tpu.memory_space<vmem>>, vector<16x8xf32>,
    %43 = vector.extract_strided_slice %19 {offsets = [0, 0, 8], sizes = [2, 8, 8], strides = [1, 1, 1]} : vector<2x8x32xbf16> to vector<2x8x8xbf16>
    %44 = vector.extract_strided_slice %21 {offsets = [0, 0, 8], sizes = [2, 8, 8], strides = [1, 1, 1]} : vector<2x8x32xbf16> to vector<2x8x8xbf16>
    %45 = vector.extract_strided_slice %23 {offsets = [0, 0, 8], sizes = [2, 8, 8], strides = [1, 1, 1]} : vector<2x8x32xbf16> to vector<2x8x8xbf16>
    "tpu.trace_start"() <{level = 10 : i32, message = "bqd,bkd->bqk"}> : () -> ()
    %cst_24 = arith.constant dense<0.000000e+00> : vector<2x8x8xf32>
    %46 = tpu.matmul %43, %44, %cst_24 {dimension_numbers = #tpu.dot_dimension_numbers<[2], [2], [1], [1], [0, 0, 0, 1, 1, 1], [0], [0]>} : vector<2x8x8xbf16>, vector<2x8x8xbf16>, vector<2x8x8xf32> -> vector<2x8x8xf32>
    "tpu.trace_stop"() : () -> ()
    %47 = arith.addf %46, %17 : vector<2x8x8xf32>
    %cst_25 = arith.constant dense<0xFF800000> : vector<2x8xf32>
    %48 = vector.multi_reduction <maximumf>, %47, %cst_25 [2] : vector<2x8x8xf32> to vector<2x8xf32>
    %49 = vector.shape_cast %48 : vector<2x8xf32> to vector<2x8x1xf32>
    %50 = vector.broadcast %49 : vector<2x8x1xf32> to vector<2x8x8xf32>
    %51 = arith.subf %47, %50 : vector<2x8x8xf32>
    %52 = math.exp %51 : vector<2x8x8xf32>
    %cst_26 = arith.constant dense<0.000000e+00> : vector<2x8xf32>
    %53 = vector.multi_reduction <add>, %52, %cst_26 [2] : vector<2x8x8xf32> to vector<2x8xf32>
    %54 = vector.shape_cast %53 : vector<2x8xf32> to vector<2x8x1xf32>
    %55 = tpu.reciprocal %54 {approx = true} : vector<2x8x1xf32> -> vector<2x8x1xf32>
    %56 = vector.broadcast %55 : vector<2x8x1xf32> to vector<2x8x8xf32>
    %57 = arith.mulf %52, %56 : vector<2x8x8xf32>
    %58 = arith.truncf %57 : vector<2x8x8xf32> to vector<2x8x8xbf16>
    "tpu.trace_start"() <{level = 10 : i32, message = "bqk,bkd->bqd"}> : () -> ()
    %cst_27 = arith.constant dense<0.000000e+00> : vector<2x8x8xf32>
    %59 = tpu.matmul %58, %45, %cst_27 {dimension_numbers = #tpu.dot_dimension_numbers<[2], [1], [1], [2], [0, 0, 0, 1, 1, 2], [0], [0]>} : vector<2x8x8xbf16>, vector<2x8x8xbf16>, vector<2x8x8xf32> -> vector<2x8x8xf32>
    "tpu.trace_stop"() : () -> ()
    %60 = vector.shape_cast %59 : vector<2x8x8xf32> to vector<16x8xf32>
    %c0_28 = arith.constant 0 : index
    %c8 = arith.constant 8 : index
    %61 = vector.load %arg20[%c0_28, %c8] : memref<16x32xf32, #tpu.memory_space<vmem>>, vector<16x8xf32>
    tpu.vector_store %arg20[%c0_28, %c8], %60 {strides = array<i32>} : memref<16x32xf32, #tpu.memory_space<vmem>>, vector<16x8xf32>,
    %62 = vector.extract_strided_slice %19 {offsets = [0, 0, 16], sizes = [2, 8, 8], strides = [1, 1, 1]} : vector<2x8x32xbf16> to vector<2x8x8xbf16>
    %63 = vector.extract_strided_slice %21 {offsets = [0, 0, 16], sizes = [2, 8, 8], strides = [1, 1, 1]} : vector<2x8x32xbf16> to vector<2x8x8xbf16>
    %64 = vector.extract_strided_slice %23 {offsets = [0, 0, 16], sizes = [2, 8, 8], strides = [1, 1, 1]} : vector<2x8x32xbf16> to vector<2x8x8xbf16>
    "tpu.trace_start"() <{level = 10 : i32, message = "bqd,bkd->bqk"}> : () -> ()
    %cst_29 = arith.constant dense<0.000000e+00> : vector<2x8x8xf32>
    %65 = tpu.matmul %62, %63, %cst_29 {dimension_numbers = #tpu.dot_dimension_numbers<[2], [2], [1], [1], [0, 0, 0, 1, 1, 1], [0], [0]>} : vector<2x8x8xbf16>, vector<2x8x8xbf16>, vector<2x8x8xf32> -> vector<2x8x8xf32>
    "tpu.trace_stop"() : () -> ()
    %66 = arith.addf %65, %17 : vector<2x8x8xf32>
    %cst_30 = arith.constant dense<0xFF800000> : vector<2x8xf32>
    %67 = vector.multi_reduction <maximumf>, %66, %cst_30 [2] : vector<2x8x8xf32> to vector<2x8xf32>
    %68 = vector.shape_cast %67 : vector<2x8xf32> to vector<2x8x1xf32>
    %69 = vector.broadcast %68 : vector<2x8x1xf32> to vector<2x8x8xf32>
    %70 = arith.subf %66, %69 : vector<2x8x8xf32>
    %71 = math.exp %70 : vector<2x8x8xf32>
    %cst_31 = arith.constant dense<0.000000e+00> : vector<2x8xf32>
    %72 = vector.multi_reduction <add>, %71, %cst_31 [2] : vector<2x8x8xf32> to vector<2x8xf32>
    %73 = vector.shape_cast %72 : vector<2x8xf32> to vector<2x8x1xf32>
    %74 = tpu.reciprocal %73 {approx = true} : vector<2x8x1xf32> -> vector<2x8x1xf32>
    %75 = vector.broadcast %74 : vector<2x8x1xf32> to vector<2x8x8xf32>
    %76 = arith.mulf %71, %75 : vector<2x8x8xf32>
    %77 = arith.truncf %76 : vector<2x8x8xf32> to vector<2x8x8xbf16>
    "tpu.trace_start"() <{level = 10 : i32, message = "bqk,bkd->bqd"}> : () -> ()
    %cst_32 = arith.constant dense<0.000000e+00> : vector<2x8x8xf32>
    %78 = tpu.matmul %77, %64, %cst_32 {dimension_numbers = #tpu.dot_dimension_numbers<[2], [1], [1], [2], [0, 0, 0, 1, 1, 2], [0], [0]>} : vector<2x8x8xbf16>, vector<2x8x8xbf16>, vector<2x8x8xf32> -> vector<2x8x8xf32>
    "tpu.trace_stop"() : () -> ()
    %79 = vector.shape_cast %78 : vector<2x8x8xf32> to vector<16x8xf32>
    %c0_33 = arith.constant 0 : index
    %c16 = arith.constant 16 : index
    %80 = vector.load %arg20[%c0_33, %c16] : memref<16x32xf32, #tpu.memory_space<vmem>>, vector<16x8xf32>
    tpu.vector_store %arg20[%c0_33, %c16], %79 {strides = array<i32>} : memref<16x32xf32, #tpu.memory_space<vmem>>, vector<16x8xf32>,
    %81 = vector.extract_strided_slice %19 {offsets = [0, 0, 24], sizes = [2, 8, 8], strides = [1, 1, 1]} : vector<2x8x32xbf16> to vector<2x8x8xbf16>
    %82 = vector.extract_strided_slice %21 {offsets = [0, 0, 24], sizes = [2, 8, 8], strides = [1, 1, 1]} : vector<2x8x32xbf16> to vector<2x8x8xbf16>
    %83 = vector.extract_strided_slice %23 {offsets = [0, 0, 24], sizes = [2, 8, 8], strides = [1, 1, 1]} : vector<2x8x32xbf16> to vector<2x8x8xbf16>
    "tpu.trace_start"() <{level = 10 : i32, message = "bqd,bkd->bqk"}> : () -> ()
    %cst_34 = arith.constant dense<0.000000e+00> : vector<2x8x8xf32>
    %84 = tpu.matmul %81, %82, %cst_34 {dimension_numbers = #tpu.dot_dimension_numbers<[2], [2], [1], [1], [0, 0, 0, 1, 1, 1], [0], [0]>} : vector<2x8x8xbf16>, vector<2x8x8xbf16>, vector<2x8x8xf32> -> vector<2x8x8xf32>
    "tpu.trace_stop"() : () -> ()
    %85 = arith.addf %84, %17 : vector<2x8x8xf32>
    %cst_35 = arith.constant dense<0xFF800000> : vector<2x8xf32>
    %86 = vector.multi_reduction <maximumf>, %85, %cst_35 [2] : vector<2x8x8xf32> to vector<2x8xf32>
    %87 = vector.shape_cast %86 : vector<2x8xf32> to vector<2x8x1xf32>
    %88 = vector.broadcast %87 : vector<2x8x1xf32> to vector<2x8x8xf32>
    %89 = arith.subf %85, %88 : vector<2x8x8xf32>
    %90 = math.exp %89 : vector<2x8x8xf32>
    %cst_36 = arith.constant dense<0.000000e+00> : vector<2x8xf32>
    %91 = vector.multi_reduction <add>, %90, %cst_36 [2] : vector<2x8x8xf32> to vector<2x8xf32>
    %92 = vector.shape_cast %91 : vector<2x8xf32> to vector<2x8x1xf32>
    %93 = tpu.reciprocal %92 {approx = true} : vector<2x8x1xf32> -> vector<2x8x1xf32>
    %94 = vector.broadcast %93 : vector<2x8x1xf32> to vector<2x8x8xf32>
    %95 = arith.mulf %90, %94 : vector<2x8x8xf32>
    %96 = arith.truncf %95 : vector<2x8x8xf32> to vector<2x8x8xbf16>
    "tpu.trace_start"() <{level = 10 : i32, message = "bqk,bkd->bqd"}> : () -> ()
    %cst_37 = arith.constant dense<0.000000e+00> : vector<2x8x8xf32>
    %97 = tpu.matmul %96, %83, %cst_37 {dimension_numbers = #tpu.dot_dimension_numbers<[2], [1], [1], [2], [0, 0, 0, 1, 1, 2], [0], [0]>} : vector<2x8x8xbf16>, vector<2x8x8xbf16>, vector<2x8x8xf32> -> vector<2x8x8xf32>
    "tpu.trace_stop"() : () -> ()
    %98 = vector.shape_cast %97 : vector<2x8x8xf32> to vector<16x8xf32>
    %c0_38 = arith.constant 0 : index
    %c24 = arith.constant 24 : index
    %99 = vector.load %arg20[%c0_38, %c24] : memref<16x32xf32, #tpu.memory_space<vmem>>, vector<16x8xf32>
    tpu.vector_store %arg20[%c0_38, %c24], %98 {strides = array<i32>} : memref<16x32xf32, #tpu.memory_space<vmem>>, vector<16x8xf32>,
    %c0_39 = arith.constant 0 : index
    %c0_40 = arith.constant 0 : index
    %100 = vector.load %arg20[%c0_39, %c0_40] : memref<16x32xf32, #tpu.memory_space<vmem>>, vector<16x32xf32>
    %101 = arith.truncf %100 : vector<16x32xf32> to vector<16x32xbf16>
    %c0_41 = arith.constant 0 : index
    %c0_42 = arith.constant 0 : index
    %102 = vector.load %arg9[%c0_41, %c0_42] : memref<32x32xbf16, #tpu.memory_space<vmem>>, vector<32x32xbf16>
    %cst_43 = arith.constant dense<0.000000e+00> : vector<16x32xf32>
    %103 = tpu.matmul %101, %102, %cst_43 {dimension_numbers = #tpu.dot_dimension_numbers<[1], [0], [0], [1], [0, 0, 1, 1], [], []>} : vector<16x32xbf16>, vector<32x32xbf16>, vector<16x32xf32> -> vector<16x32xf32>
    %c0_44 = arith.constant 0 : index
    %c0_45 = arith.constant 0 : index
    %104 = vector.load %arg10[%c0_44, %c0_45] : memref<1x32xf32, #tpu.memory_space<vmem>>, vector<1x32xf32>
    %105 = vector.broadcast %104 : vector<1x32xf32> to vector<16x32xf32>
    %106 = arith.addf %103, %105 : vector<16x32xf32>
    %107 = arith.addf %0, %106 : vector<16x32xf32>
    %c0_46 = arith.constant 0 : index
    %c0_47 = arith.constant 0 : index
    %108 = vector.load %arg11[%c0_46, %c0_47] : memref<1x32xf32, #tpu.memory_space<vmem>>, vector<1x32xf32>
    %c0_48 = arith.constant 0 : index
    %c0_49 = arith.constant 0 : index
    %109 = vector.load %arg12[%c0_48, %c0_49] : memref<1x32xf32, #tpu.memory_space<vmem>>, vector<1x32xf32>
    %cst_50 = arith.constant dense<0.000000e+00> : vector<16xf32>
    %110 = vector.multi_reduction <add>, %107, %cst_50 [1] : vector<16x32xf32> to vector<16xf32>
    %111 = vector.shape_cast %110 : vector<16xf32> to vector<16x1xf32>
    %cst_51 = arith.constant 3.200000e+01 : f32
    %112 = vector.broadcast %cst_51 : f32 to vector<16x1xf32>
    %113 = arith.divf %111, %112 : vector<16x1xf32>
    %114 = vector.broadcast %113 : vector<16x1xf32> to vector<16x32xf32>
    %115 = arith.subf %107, %114 : vector<16x32xf32>
    %116 = arith.mulf %115, %115 : vector<16x32xf32>
    %cst_52 = arith.constant dense<0.000000e+00> : vector<16xf32>
    %117 = vector.multi_reduction <add>, %116, %cst_52 [1] : vector<16x32xf32> to vector<16xf32>
    %118 = vector.shape_cast %117 : vector<16xf32> to vector<16x1xf32>
    %cst_53 = arith.constant 3.200000e+01 : f32
    %119 = vector.broadcast %cst_53 : f32 to vector<16x1xf32>
    %120 = arith.divf %118, %119 : vector<16x1xf32>
    %121 = vector.broadcast %113 : vector<16x1xf32> to vector<16x32xf32>
    %122 = arith.subf %107, %121 : vector<16x32xf32>
    %cst_54 = arith.constant 9.99999974E-6 : f32
    %123 = vector.broadcast %cst_54 : f32 to vector<16x1xf32>
    %124 = arith.addf %120, %123 : vector<16x1xf32>
    %125 = math.rsqrt %124 : vector<16x1xf32>
    %126 = vector.broadcast %125 : vector<16x1xf32> to vector<16x32xf32>
    %127 = arith.mulf %122, %126 : vector<16x32xf32>
    %128 = vector.broadcast %108 : vector<1x32xf32> to vector<16x32xf32>
    %129 = arith.mulf %127, %128 : vector<16x32xf32>
    %130 = vector.broadcast %109 : vector<1x32xf32> to vector<16x32xf32>
    %131 = arith.addf %129, %130 : vector<16x32xf32>
    %132 = arith.truncf %131 : vector<16x32xf32> to vector<16x32xbf16>
    %c0_55 = arith.constant 0 : index
    %c0_56 = arith.constant 0 : index
    %133 = vector.load %arg13[%c0_55, %c0_56] : memref<32x64xbf16, #tpu.memory_space<vmem>>, vector<32x64xbf16>
    %cst_57 = arith.constant dense<0.000000e+00> : vector<16x64xf32>
    %134 = tpu.matmul %132, %133, %cst_57 {dimension_numbers = #tpu.dot_dimension_numbers<[1], [0], [0], [1], [0, 0, 1, 1], [], []>} : vector<16x32xbf16>, vector<32x64xbf16>, vector<16x64xf32> -> vector<16x64xf32>
    %c0_58 = arith.constant 0 : index
    %c0_59 = arith.constant 0 : index
    %135 = vector.load %arg14[%c0_58, %c0_59] : memref<1x64xf32, #tpu.memory_space<vmem>>, vector<1x64xf32>
    %136 = vector.broadcast %135 : vector<1x64xf32> to vector<16x64xf32>
    %137 = arith.addf %134, %136 : vector<16x64xf32>
    %cst_60 = arith.constant 0.000000e+00 : f32
    %138 = vector.broadcast %cst_60 : f32 to vector<16x64xf32>
    %139 = arith.maximumf %137, %138 : vector<16x64xf32>
    %140 = arith.truncf %139 : vector<16x64xf32> to vector<16x64xbf16>
    %c0_61 = arith.constant 0 : index
    %c0_62 = arith.constant 0 : index
    %141 = vector.load %arg15[%c0_61, %c0_62] : memref<64x32xbf16, #tpu.memory_space<vmem>>, vector<64x32xbf16>
    %cst_63 = arith.constant dense<0.000000e+00> : vector<16x32xf32>
    %142 = tpu.matmul %140, %141, %cst_63 {dimension_numbers = #tpu.dot_dimension_numbers<[1], [0], [0], [1], [0, 0, 1, 1], [], []>} : vector<16x64xbf16>, vector<64x32xbf16>, vector<16x32xf32> -> vector<16x32xf32>
    %c0_64 = arith.constant 0 : index
    %c0_65 = arith.constant 0 : index
    %143 = vector.load %arg16[%c0_64, %c0_65] : memref<1x32xf32, #tpu.memory_space<vmem>>, vector<1x32xf32>
    %144 = vector.broadcast %143 : vector<1x32xf32> to vector<16x32xf32>
    %145 = arith.addf %142, %144 : vector<16x32xf32>
    %146 = arith.addf %131, %145 : vector<16x32xf32>
    %c0_66 = arith.constant 0 : index
    %c0_67 = arith.constant 0 : index
    %147 = vector.load %arg17[%c0_66, %c0_67] : memref<1x32xf32, #tpu.memory_space<vmem>>, vector<1x32xf32>
    %c0_68 = arith.constant 0 : index
    %c0_69 = arith.constant 0 : index
    %148 = vector.load %arg18[%c0_68, %c0_69] : memref<1x32xf32, #tpu.memory_space<vmem>>, vector<1x32xf32>
    %cst_70 = arith.constant dense<0.000000e+00> : vector<16xf32>
    %149 = vector.multi_reduction <add>, %146, %cst_70 [1] : vector<16x32xf32> to vector<16xf32>
    %150 = vector.shape_cast %149 : vector<16xf32> to vector<16x1xf32>
    %cst_71 = arith.constant 3.200000e+01 : f32
    %151 = vector.broadcast %cst_71 : f32 to vector<16x1xf32>
    %152 = arith.divf %150, %151 : vector<16x1xf32>
    %153 = vector.broadcast %152 : vector<16x1xf32> to vector<16x32xf32>
    %154 = arith.subf %146, %153 : vector<16x32xf32>
    %155 = arith.mulf %154, %154 : vector<16x32xf32>
    %cst_72 = arith.constant dense<0.000000e+00> : vector<16xf32>
    %156 = vector.multi_reduction <add>, %155, %cst_72 [1] : vector<16x32xf32> to vector<16xf32>
    %157 = vector.shape_cast %156 : vector<16xf32> to vector<16x1xf32>
    %cst_73 = arith.constant 3.200000e+01 : f32
    %158 = vector.broadcast %cst_73 : f32 to vector<16x1xf32>
    %159 = arith.divf %157, %158 : vector<16x1xf32>
    %160 = vector.broadcast %152 : vector<16x1xf32> to vector<16x32xf32>
    %161 = arith.subf %146, %160 : vector<16x32xf32>
    %cst_74 = arith.constant 9.99999974E-6 : f32
    %162 = vector.broadcast %cst_74 : f32 to vector<16x1xf32>
    %163 = arith.addf %159, %162 : vector<16x1xf32>
    %164 = math.rsqrt %163 : vector<16x1xf32>
    %165 = vector.broadcast %164 : vector<16x1xf32> to vector<16x32xf32>
    %166 = arith.mulf %161, %165 : vector<16x32xf32>
    %167 = vector.broadcast %147 : vector<1x32xf32> to vector<16x32xf32>
    %168 = arith.mulf %166, %167 : vector<16x32xf32>
    %169 = vector.broadcast %148 : vector<1x32xf32> to vector<16x32xf32>
    %170 = arith.addf %168, %169 : vector<16x32xf32>
    %c0_75 = arith.constant 0 : index
    %c0_76 = arith.constant 0 : index
    %171 = vector.load %arg19[%c0_75, %c0_76] : memref<16x32xf32, #tpu.memory_space<vmem>>, vector<16x32xf32>
    tpu.vector_store %arg19[%c0_75, %c0_76], %170 {strides = array<i32>} : memref<16x32xf32, #tpu.memory_space<vmem>>, vector<16x32xf32>,
    return
  }
  func.func @transform_0(%arg0: i32) -> (i32, i32) {
    %c0_i32 = arith.constant 0 : i32
    %c0_i32_0 = arith.constant 0 : i32
    return %arg0, %c0_i32 : i32, i32
  }
  func.func @transform_1(%arg0: i32) -> (i32, i32, i32) {
    %c0_i32 = arith.constant 0 : i32
    %c0_i32_0 = arith.constant 0 : i32
    %c0_i32_1 = arith.constant 0 : i32
    return %arg0, %c0_i32, %c0_i32_0 : i32, i32, i32
  }
  func.func @transform_2(%arg0: i32) -> (i32, i32) {
    %c0_i32 = arith.constant 0 : i32
    %c0_i32_0 = arith.constant 0 : i32
    %c0_i32_1 = arith.constant 0 : i32
    return %c0_i32, %c0_i32_0 : i32, i32
  }
  func.func @transform_3(%arg0: i32) -> (i32, i32) {
    %c0_i32 = arith.constant 0 : i32
    %c0_i32_0 = arith.constant 0 : i32
    %c0_i32_1 = arith.constant 0 : i32
    return %c0_i32, %c0_i32_0 : i32, i32
  }
  func.func @transform_4(%arg0: i32) -> (i32, i32) {
    %c0_i32 = arith.constant 0 : i32
    %c0_i32_0 = arith.constant 0 : i32
    %c0_i32_1 = arith.constant 0 : i32
    return %c0_i32, %c0_i32_0 : i32, i32
  }
  func.func @transform_5(%arg0: i32) -> (i32, i32) {
    %c0_i32 = arith.constant 0 : i32
    %c0_i32_0 = arith.constant 0 : i32
    %c0_i32_1 = arith.constant 0 : i32
    return %c0_i32, %c0_i32_0 : i32, i32
  }
  func.func @transform_6(%arg0: i32) -> (i32, i32) {
    %c0_i32 = arith.constant 0 : i32
    %c0_i32_0 = arith.constant 0 : i32
    %c0_i32_1 = arith.constant 0 : i32
    return %c0_i32, %c0_i32_0 : i32, i32
  }
  func.func @transform_7(%arg0: i32) -> (i32, i32) {
    %c0_i32 = arith.constant 0 : i32
    %c0_i32_0 = arith.constant 0 : i32
    %c0_i32_1 = arith.constant 0 : i32
    return %c0_i32, %c0_i32_0 : i32, i32
  }
  func.func @transform_8(%arg0: i32) -> (i32, i32) {
    %c0_i32 = arith.constant 0 : i32
    %c0_i32_0 = arith.constant 0 : i32
    %c0_i32_1 = arith.constant 0 : i32
    return %c0_i32, %c0_i32_0 : i32, i32
  }
  func.func @transform_9(%arg0: i32) -> (i32, i32) {
    %c0_i32 = arith.constant 0 : i32
    %c0_i32_0 = arith.constant 0 : i32
    %c0_i32_1 = arith.constant 0 : i32
    return %c0_i32, %c0_i32_0 : i32, i32
  }
  func.func @transform_10(%arg0: i32) -> (i32, i32) {
    %c0_i32 = arith.constant 0 : i32
    %c0_i32_0 = arith.constant 0 : i32
    %c0_i32_1 = arith.constant 0 : i32
    return %c0_i32, %c0_i32_0 : i32, i32
  }
  func.func @transform_11(%arg0: i32) -> (i32, i32) {
    %c0_i32 = arith.constant 0 : i32
    %c0_i32_0 = arith.constant 0 : i32
    %c0_i32_1 = arith.constant 0 : i32
    return %c0_i32, %c0_i32_0 : i32, i32
  }
  func.func @transform_12(%arg0: i32) -> (i32, i32) {
    %c0_i32 = arith.constant 0 : i32
    %c0_i32_0 = arith.constant 0 : i32
    %c0_i32_1 = arith.constant 0 : i32
    return %c0_i32, %c0_i32_0 : i32, i32
  }
  func.func @transform_13(%arg0: i32) -> (i32, i32) {
    %c0_i32 = arith.constant 0 : i32
    %c0_i32_0 = arith.constant 0 : i32
    %c0_i32_1 = arith.constant 0 : i32
    return %c0_i32, %c0_i32_0 : i32, i32
  }
  func.func @transform_14(%arg0: i32) -> (i32, i32) {
    %c0_i32 = arith.constant 0 : i32
    %c0_i32_0 = arith.constant 0 : i32
    %c0_i32_1 = arith.constant 0 : i32
    return %c0_i32, %c0_i32_0 : i32, i32
  }
  func.func @transform_15(%arg0: i32) -> (i32, i32) {
    %c0_i32 = arith.constant 0 : i32
    %c0_i32_0 = arith.constant 0 : i32
    %c0_i32_1 = arith.constant 0 : i32
    return %c0_i32, %c0_i32_0 : i32, i32
  }
  func.func @transform_16(%arg0: i32) -> (i32, i32) {
    %c0_i32 = arith.constant 0 : i32
    %c0_i32_0 = arith.constant 0 : i32
    %c0_i32_1 = arith.constant 0 : i32
    return %c0_i32, %c0_i32_0 : i32, i32
  }
  func.func @transform_17(%arg0: i32) -> (i32, i32) {
    %c0_i32 = arith.constant 0 : i32
    %c0_i32_0 = arith.constant 0 : i32
    %c0_i32_1 = arith.constant 0 : i32
    return %c0_i32, %c0_i32_0 : i32, i32
  }
  func.func @transform_18(%arg0: i32) -> (i32, i32) {
    %c0_i32 = arith.constant 0 : i32
    %c0_i32_0 = arith.constant 0 : i32
    return %arg0, %c0_i32 : i32, i32
  }
}

</mosaic_0001>

<llo_original>
// kernel: multi_level_encoder.2
$region0: #{multi_level_encoder.2}
  #allocation0 [shape = 'u32[]', space=smem, size = 0x4, offset = 0x4, fixed_abs, tag = 'smem constant byte address 0x4 - core index']
  #allocation1 [shape = 'u32[72,128]{1,0:T(1,128)}', space=vmem, size = 0x9000, scoped, tag = 'internal scratch']
  #allocation2 [shape = 'f32[16,32]{1,0:T(8,128)}', space=vmem, size = 0x2000, scoped, tag = 'scratch operand']
  %s0 = inlined_call_operand.vmem [shape: f32[16,32], index: 0, kind: input, shape index: {}, may-alias: {0,18}]
  %s1 = inlined_call_operand.vmem [shape: f32[2,8,8], index: 1, kind: input, shape index: {}]
  %s2 = inlined_call_operand.vmem [shape: bf16[32,32], index: 2, kind: input, shape index: {}]
  %s3 = inlined_call_operand.vmem [shape: f32[1,32], index: 3, kind: input, shape index: {}]
  %s4 = inlined_call_operand.vmem [shape: bf16[32,32], index: 4, kind: input, shape index: {}]
  %s5 = inlined_call_operand.vmem [shape: f32[1,32], index: 5, kind: input, shape index: {}]
  %s6 = inlined_call_operand.vmem [shape: bf16[32,32], index: 6, kind: input, shape index: {}]
  %s7 = inlined_call_operand.vmem [shape: f32[1,32], index: 7, kind: input, shape index: {}]
  %s8 = inlined_call_operand.vmem [shape: bf16[32,32], index: 8, kind: input, shape index: {}]
  %s9 = inlined_call_operand.vmem [shape: f32[1,32], index: 9, kind: input, shape index: {}]
  %s10 = inlined_call_operand.vmem [shape: f32[1,32], index: 10, kind: input, shape index: {}]
  %s11 = inlined_call_operand.vmem [shape: f32[1,32], index: 11, kind: input, shape index: {}]
  %s12 = inlined_call_operand.vmem [shape: bf16[32,64], index: 12, kind: input, shape index: {}]
  %s13 = inlined_call_operand.vmem [shape: f32[1,64], index: 13, kind: input, shape index: {}]
  %s14 = inlined_call_operand.vmem [shape: bf16[64,32], index: 14, kind: input, shape index: {}]
  %s15 = inlined_call_operand.vmem [shape: f32[1,32], index: 15, kind: input, shape index: {}]
  %s16 = inlined_call_operand.vmem [shape: f32[1,32], index: 16, kind: input, shape index: {}]
  %s17 = inlined_call_operand.vmem [shape: f32[1,32], index: 17, kind: input, shape index: {}]
  %s18 = inlined_call_operand.vmem [shape: f32[16,32], index: 18, kind: output, shape index: {}, may-alias: {0,18}]
  %s19 = sld [smem:[#allocation0]]
  $region82: #{multi_level_encoder.2} parent=0
    _
  %s21 = ssub.s32 1, %s19
  %s22 = scalar_select 0, %s21, %s19
  // Predicated region
  $region2: #{multi_level_encoder.2} parent=0 // pred_check
    _
  $region3: #{multi_level_encoder.2} parent=0 // pred_check_branch
    %24 = sbr.rel (0) target = $region5
  $region4: #{multi_level_encoder.2} parent=0 // pred_region
    _
  $region5: #{multi_level_encoder.2} parent=0 // pred_fallthru
    _
  // Predicated region
  $region6: #{multi_level_encoder.2} parent=0 // pred_check
    _
  $region7: #{multi_level_encoder.2} parent=0 // pred_check_branch
    %26 = sbr.rel (0) target = $region9
  $region8: #{multi_level_encoder.2} parent=0 // pred_region
    _
  $region9: #{multi_level_encoder.2} parent=0 // pred_fallthru
    _
  // Predicated region
  $region10: #{multi_level_encoder.2} parent=0 // pred_check
    _
  $region11: #{multi_level_encoder.2} parent=0 // pred_check_branch
    %28 = sbr.rel (0) target = $region13
  $region12: #{multi_level_encoder.2} parent=0 // pred_region
    _
  $region13: #{multi_level_encoder.2} parent=0 // pred_fallthru
    _
  // Predicated region
  $region14: #{multi_level_encoder.2} parent=0 // pred_check
    _
  $region15: #{multi_level_encoder.2} parent=0 // pred_check_branch
    %30 = sbr.rel (0) target = $region17
  $region16: #{multi_level_encoder.2} parent=0 // pred_region
    _
  $region17: #{multi_level_encoder.2} parent=0 // pred_fallthru
    _
  // Predicated region
  $region18: #{multi_level_encoder.2} parent=0 // pred_check
    _
  $region19: #{multi_level_encoder.2} parent=0 // pred_check_branch
    %32 = sbr.rel (0) target = $region21
  $region20: #{multi_level_encoder.2} parent=0 // pred_region
    _
  $region21: #{multi_level_encoder.2} parent=0 // pred_fallthru
    _
  // Predicated region
  $region22: #{multi_level_encoder.2} parent=0 // pred_check
    _
  $region23: #{multi_level_encoder.2} parent=0 // pred_check_branch
    %34 = sbr.rel (0) target = $region25
  $region24: #{multi_level_encoder.2} parent=0 // pred_region
    _
  $region25: #{multi_level_encoder.2} parent=0 // pred_fallthru
    _
  // Predicated region
  $region26: #{multi_level_encoder.2} parent=0 // pred_check
    _
  $region27: #{multi_level_encoder.2} parent=0 // pred_check_branch
    %36 = sbr.rel (0) target = $region29
  $region28: #{multi_level_encoder.2} parent=0 // pred_region
    _
  $region29: #{multi_level_encoder.2} parent=0 // pred_fallthru
    _
  // Predicated region
  $region30: #{multi_level_encoder.2} parent=0 // pred_check
    _
  $region31: #{multi_level_encoder.2} parent=0 // pred_check_branch
    %38 = sbr.rel (0) target = $region33
  $region32: #{multi_level_encoder.2} parent=0 // pred_region
    _
  $region33: #{multi_level_encoder.2} parent=0 // pred_fallthru
    _
  // Predicated region
  $region34: #{multi_level_encoder.2} parent=0 // pred_check
    _
  $region35: #{multi_level_encoder.2} parent=0 // pred_check_branch
    %40 = sbr.rel (0) target = $region37
  $region36: #{multi_level_encoder.2} parent=0 // pred_region
    _
  $region37: #{multi_level_encoder.2} parent=0 // pred_fallthru
    _
  // Predicated region
  $region38: #{multi_level_encoder.2} parent=0 // pred_check
    _
  $region39: #{multi_level_encoder.2} parent=0 // pred_check_branch
    %42 = sbr.rel (0) target = $region41
  $region40: #{multi_level_encoder.2} parent=0 // pred_region
    _
  $region41: #{multi_level_encoder.2} parent=0 // pred_fallthru
    _
  // Predicated region
  $region42: #{multi_level_encoder.2} parent=0 // pred_check
    _
  $region43: #{multi_level_encoder.2} parent=0 // pred_check_branch
    %44 = sbr.rel (0) target = $region45
  $region44: #{multi_level_encoder.2} parent=0 // pred_region
    _
  $region45: #{multi_level_encoder.2} parent=0 // pred_fallthru
    _
  // Predicated region
  $region46: #{multi_level_encoder.2} parent=0 // pred_check
    _
  $region47: #{multi_level_encoder.2} parent=0 // pred_check_branch
    %46 = sbr.rel (0) target = $region49
  $region48: #{multi_level_encoder.2} parent=0 // pred_region
    _
  $region49: #{multi_level_encoder.2} parent=0 // pred_fallthru
    _
  // Predicated region
  $region50: #{multi_level_encoder.2} parent=0 // pred_check
    _
  $region51: #{multi_level_encoder.2} parent=0 // pred_check_branch
    %48 = sbr.rel (0) target = $region53
  $region52: #{multi_level_encoder.2} parent=0 // pred_region
    _
  $region53: #{multi_level_encoder.2} parent=0 // pred_fallthru
    _
  // Predicated region
  $region54: #{multi_level_encoder.2} parent=0 // pred_check
    _
  $region55: #{multi_level_encoder.2} parent=0 // pred_check_branch
    %50 = sbr.rel (0) target = $region57
  $region56: #{multi_level_encoder.2} parent=0 // pred_region
    _
  $region57: #{multi_level_encoder.2} parent=0 // pred_fallthru
    _
  // Predicated region
  $region58: #{multi_level_encoder.2} parent=0 // pred_check
    _
  $region59: #{multi_level_encoder.2} parent=0 // pred_check_branch
    %52 = sbr.rel (0) target = $region61
  $region60: #{multi_level_encoder.2} parent=0 // pred_region
    _
  $region61: #{multi_level_encoder.2} parent=0 // pred_fallthru
    _
  // Predicated region
  $region62: #{multi_level_encoder.2} parent=0 // pred_check
    _
  $region63: #{multi_level_encoder.2} parent=0 // pred_check_branch
    %54 = sbr.rel (0) target = $region65
  $region64: #{multi_level_encoder.2} parent=0 // pred_region
    _
  $region65: #{multi_level_encoder.2} parent=0 // pred_fallthru
    _
  // Predicated region
  $region66: #{multi_level_encoder.2} parent=0 // pred_check
    _
  $region67: #{multi_level_encoder.2} parent=0 // pred_check_branch
    %56 = sbr.rel (0) target = $region69
  $region68: #{multi_level_encoder.2} parent=0 // pred_region
    _
  $region69: #{multi_level_encoder.2} parent=0 // pred_fallthru
    _
  // Predicated region
  $region70: #{multi_level_encoder.2} parent=0 // pred_check
    _
  $region71: #{multi_level_encoder.2} parent=0 // pred_check_branch
    %58 = sbr.rel (0) target = $region73
  $region72: #{multi_level_encoder.2} parent=0 // pred_region
    _
  $region73: #{multi_level_encoder.2} parent=0 // pred_fallthru
    _
  %v60 = vld [vmem:[%s0] sm:$0xff]
  %v61 = vld [vmem:[%s0 + $0x8] sm:$0xff]
  %v62 = vpack.c.bf16 %v61, %v60
  %v63 = vld [vmem:[%s2] sm:$0xf]
  %v64 = vld [vmem:[%s2 + $0x4] sm:$0xf]
  %v65 = vld [vmem:[%s2 + $0x8] sm:$0xf]
  %v66 = vld [vmem:[%s2 + $0xc] sm:$0xf]
  %v67 = vld [vmem:[%s3] sm:$0x1]
  %v69 = vperm.slane %v67, 0
  %v75 = vunpack.c.l.b16 %v63
  %v76 = vunpack.c.l.b16 %v64
  %v77 = vunpack.c.l.b16 %v65
  %v78 = vunpack.c.l.b16 %v66
  %v79 = vpack.c.b16 %v76, %v75
  %v80 = vpack.c.b16 %v78, %v77
  %vm83 = vcmask 261120
  %v85 = vsel %vm83, %v62, 0
  %87 = vmatpush.bf16.msra.mxu0 0
  %88 = vmatpush.bf16.msra.mxu0 0
  %89 = vmatpush.bf16.msra.mxu0 0
  %90 = vmatpush.bf16.msra.mxu0 0
  %91 = vmatpush.bf16.msra.mxu0 0
  %92 = vmatpush.bf16.msra.mxu0 0
  %93 = vmatpush.bf16.msra.mxu0 %v80
  %94 = vmatpush.bf16.msra.mxu0 %v79
  %95 = vmatmul.bf16.gmra.mxu0 %v85
  %v96 = vpop.f32.mrf.mxu0
  %v97 = vadd.f32 %v69, %v96
  %v98 = vpop.f32.mrf.mxu0
  %v99 = vadd.f32 %v69, %v98
  %100 = vdwg.mxu0
  %v101 = vld [vmem:[%s4] sm:$0xf]
  %v102 = vld [vmem:[%s4 + $0x4] sm:$0xf]
  %v103 = vld [vmem:[%s4 + $0x8] sm:$0xf]
  %v104 = vld [vmem:[%s4 + $0xc] sm:$0xf]
  %v105 = vld [vmem:[%s5] sm:$0x1]
  %v107 = vperm.slane %v105, 0
  %v113 = vunpack.c.l.b16 %v101
  %v114 = vunpack.c.l.b16 %v102
  %v115 = vunpack.c.l.b16 %v103
  %v116 = vunpack.c.l.b16 %v104
  %v117 = vpack.c.b16 %v114, %v113
  %v118 = vpack.c.b16 %v116, %v115
  %121 = vmatpush.bf16.msra.mxu0 0
  %122 = vmatpush.bf16.msra.mxu0 0
  %123 = vmatpush.bf16.msra.mxu0 0
  %124 = vmatpush.bf16.msra.mxu0 0
  %125 = vmatpush.bf16.msra.mxu0 0
  %126 = vmatpush.bf16.msra.mxu0 0
  %127 = vmatpush.bf16.msra.mxu0 %v118
  %128 = vmatpush.bf16.msra.mxu0 %v117
  %129 = vmatmul.bf16.gmra.mxu0 %v85
  %v130 = vpop.f32.mrf.mxu0
  %v131 = vadd.f32 %v107, %v130
  %v132 = vpop.f32.mrf.mxu0
  %v133 = vadd.f32 %v107, %v132
  %134 = vdwg.mxu0
  %v135 = vld [vmem:[%s6] sm:$0xf]
  %v136 = vld [vmem:[%s6 + $0x4] sm:$0xf]
  %v137 = vld [vmem:[%s6 + $0x8] sm:$0xf]
  %v138 = vld [vmem:[%s6 + $0xc] sm:$0xf]
  %v139 = vld [vmem:[%s7] sm:$0x1]
  %v141 = vperm.slane %v139, 0
  %v147 = vunpack.c.l.b16 %v135
  %v148 = vunpack.c.l.b16 %v136
  %v149 = vunpack.c.l.b16 %v137
  %v150 = vunpack.c.l.b16 %v138
  %v151 = vpack.c.b16 %v148, %v147
  %v152 = vpack.c.b16 %v150, %v149
  %155 = vmatpush.bf16.msra.mxu0 0
  %156 = vmatpush.bf16.msra.mxu0 0
  %157 = vmatpush.bf16.msra.mxu0 0
  %158 = vmatpush.bf16.msra.mxu0 0
  %159 = vmatpush.bf16.msra.mxu0 0
  %160 = vmatpush.bf16.msra.mxu0 0
  %161 = vmatpush.bf16.msra.mxu0 %v152
  %162 = vmatpush.bf16.msra.mxu0 %v151
  %163 = vmatmul.bf16.gmra.mxu0 %v85
  %v164 = vpop.f32.mrf.mxu0
  %v165 = vadd.f32 %v141, %v164
  %v166 = vpop.f32.mrf.mxu0
  %v167 = vadd.f32 %v141, %v166
  %168 = vdwg.mxu0
  %v169 = vld [vmem:[%s1] sm:$0xff]
  %v170 = vld [vmem:[%s1 + $0x8] sm:$0xff]
  %v171 = vpack.c.bf16 %v97, %v97
  %v172 = vpack.c.bf16 %v99, %v99
  %v173 = vpack.c.bf16 %v131, %v131
  %v174 = vpack.c.bf16 %v133, %v133
  %v175 = vpack.c.bf16 %v165, %v165
  %v176 = vpack.c.bf16 %v167, %v167
  %vm177 = vcmask 64512
  %v179 = vsel %vm177, %v171, 0
  %v182 = vsel %vm177, %v173, 0
  %184 = vmatpush.bf16.xpose.msra.mxu0 0
  %185 = vmatpush.bf16.xpose.msra.mxu0 0
  %186 = vmatpush.bf16.xpose.msra.mxu0 0
  %187 = vmatpush.bf16.xpose.msra.mxu0 0
  %188 = vmatpush.bf16.xpose.msra.mxu0 0
  %189 = vmatpush.bf16.xpose.msra.mxu0 0
  %190 = vmatpush.bf16.xpose.msra.mxu0 0
  %191 = vmatpush.bf16.xpose.msra.mxu0 %v182
  %192 = vmatmul.bf16.gmra.mxu0 %v179
  %v193 = vpop.f32.mrf.mxu0
  %v194 = vadd.f32 %v169, %v193
  %v195 = vpop.f32.mrf.mxu0
  %196 = vdwg.mxu0
  %v198 = vsel %vm177, %v172, 0
  %v201 = vsel %vm177, %v174, 0
  %203 = vmatpush.bf16.xpose.msra.mxu0 0
  %204 = vmatpush.bf16.xpose.msra.mxu0 0
  %205 = vmatpush.bf16.xpose.msra.mxu0 0
  %206 = vmatpush.bf16.xpose.msra.mxu0 0
  %207 = vmatpush.bf16.xpose.msra.mxu0 0
  %208 = vmatpush.bf16.xpose.msra.mxu0 0
  %209 = vmatpush.bf16.xpose.msra.mxu0 0
  %210 = vmatpush.bf16.xpose.msra.mxu0 %v201
  %211 = vmatmul.bf16.gmra.mxu0 %v198
  %v212 = vpop.f32.mrf.mxu0
  %v213 = vadd.f32 %v170, %v212
  %v214 = vpop.f32.mrf.mxu0
  %215 = vdwg.mxu0
  %v216 = vsel %vm177, %v194, -inf
  %217 = vmax.xlane.f32.xlu0 %v216
  %v218 = vpop.xlane.xlu0 %217
  %v219 = vsel %vm177, %v213, -inf
  %220 = vmax.xlane.f32.xlu0 %v219
  %v221 = vpop.xlane.xlu0 %220
  %v222 = vsub.f32 %v194, %v218
  %v223 = vsub.f32 %v213, %v221
  %v224 = vmul.f32 %v222, 1.442695
  %v225 = vpow.pop %v224
  %v226 = vmul.f32 %v223, 1.442695
  %v227 = vpow.pop %v226
  %v228 = vsel %vm177, %v225, 0.0
  %229 = vadd.xlane.f32.xlu0 %v228
  %v230 = vpop.xlane.xlu0 %229
  %v231 = vsel %vm177, %v227, 0.0
  %232 = vadd.xlane.f32.xlu0 %v231
  %v233 = vpop.xlane.xlu0 %232
  %v234 = vrcp.pop %v230
  %v235 = vrcp.pop %v233
  %v236 = vmul.f32 %v225, %v234
  %v237 = vmul.f32 %v227, %v235
  %v238 = vpack.c.bf16 %v236, %v236
  %v239 = vpack.c.bf16 %v237, %v237
  %v241 = vsel %vm177, %v238, 0
  %vm243 = vcmask 1043456
  %v245 = vsel %vm243, %v175, 0
  %247 = vmatpush.bf16.msra.mxu0 0
  %248 = vmatpush.bf16.msra.mxu0 0
  %249 = vmatpush.bf16.msra.mxu0 0
  %250 = vmatpush.bf16.msra.mxu0 0
  %251 = vmatpush.bf16.msra.mxu0 0
  %252 = vmatpush.bf16.msra.mxu0 0
  %253 = vmatpush.bf16.msra.mxu0 0
  %254 = vmatpush.bf16.msra.mxu0 %v245
  %255 = vmatmul.bf16.gmra.mxu0 %v241
  %v256 = vpop.f32.mrf.mxu0
  %v257 = vadd.f32 0.0, %v256
  %v258 = vpop.f32.mrf.mxu0
  %259 = vdwg.mxu0
  %v261 = vsel %vm177, %v239, 0
  %v264 = vsel %vm243, %v176, 0
  %266 = vmatpush.bf16.msra.mxu0 0
  %267 = vmatpush.bf16.msra.mxu0 0
  %268 = vmatpush.bf16.msra.mxu0 0
  %269 = vmatpush.bf16.msra.mxu0 0
  %270 = vmatpush.bf16.msra.mxu0 0
  %271 = vmatpush.bf16.msra.mxu0 0
  %272 = vmatpush.bf16.msra.mxu0 0
  %273 = vmatpush.bf16.msra.mxu0 %v264
  %274 = vmatmul.bf16.gmra.mxu0 %v261
  %v275 = vpop.f32.mrf.mxu0
  %v276 = vadd.f32 0.0, %v275
  %v277 = vpop.f32.mrf.mxu0
  %278 = vdwg.mxu0
  %279 = vst.msk [vmem:[#allocation2] sm:$0xff] %vm177, %v257
  %280 = vst.msk [vmem:[#allocation2 + $0x8] sm:$0xff] %vm177, %v276
  %v282 = vunpack.c.l.b16 %v171
  %v283 = vpack.c.b16 %v282, %v282
  %284 = vrot.lane.b32.xlu0 %v283, 120
  %v285 = vpop.permute.xlu0 %284
  %v287 = vunpack.c.l.b16 %v173
  %v288 = vpack.c.b16 %v287, %v287
  %289 = vrot.lane.b32.xlu0 %v288, 120
  %v290 = vpop.permute.xlu0 %289
  %v292 = vsel %vm177, %v285, 0
  %v295 = vsel %vm177, %v290, 0
  %297 = vmatpush.bf16.xpose.msra.mxu0 0
  %298 = vmatpush.bf16.xpose.msra.mxu0 0
  %299 = vmatpush.bf16.xpose.msra.mxu0 0
  %300 = vmatpush.bf16.xpose.msra.mxu0 0
  %301 = vmatpush.bf16.xpose.msra.mxu0 0
  %302 = vmatpush.bf16.xpose.msra.mxu0 0
  %303 = vmatpush.bf16.xpose.msra.mxu0 0
  %304 = vmatpush.bf16.xpose.msra.mxu0 %v295
  %305 = vmatmul.bf16.gmra.mxu0 %v292
  %v306 = vpop.f32.mrf.mxu0
  %v307 = vadd.f32 %v169, %v306
  %v308 = vpop.f32.mrf.mxu0
  %309 = vdwg.mxu0
  %v311 = vunpack.c.l.b16 %v172
  %v312 = vpack.c.b16 %v311, %v311
  %313 = vrot.lane.b32.xlu0 %v312, 120
  %v314 = vpop.permute.xlu0 %313
  %v316 = vunpack.c.l.b16 %v174
  %v317 = vpack.c.b16 %v316, %v316
  %318 = vrot.lane.b32.xlu0 %v317, 120
  %v319 = vpop.permute.xlu0 %318
  %v321 = vsel %vm177, %v314, 0
  %v324 = vsel %vm177, %v319, 0
  %326 = vmatpush.bf16.xpose.msra.mxu0 0
  %327 = vmatpush.bf16.xpose.msra.mxu0 0
  %328 = vmatpush.bf16.xpose.msra.mxu0 0
  %329 = vmatpush.bf16.xpose.msra.mxu0 0
  %330 = vmatpush.bf16.xpose.msra.mxu0 0
  %331 = vmatpush.bf16.xpose.msra.mxu0 0
  %332 = vmatpush.bf16.xpose.msra.mxu0 0
  %333 = vmatpush.bf16.xpose.msra.mxu0 %v324
  %334 = vmatmul.bf16.gmra.mxu0 %v321
  %v335 = vpop.f32.mrf.mxu0
  %v336 = vadd.f32 %v170, %v335
  %v337 = vpop.f32.mrf.mxu0
  %338 = vdwg.mxu0
  %v339 = vsel %vm177, %v307, -inf
  %340 = vmax.xlane.f32.xlu0 %v339
  %v341 = vpop.xlane.xlu0 %340
  %v342 = vsel %vm177, %v336, -inf
  %343 = vmax.xlane.f32.xlu0 %v342
  %v344 = vpop.xlane.xlu0 %343
  %v345 = vsub.f32 %v307, %v341
  %v346 = vsub.f32 %v336, %v344
  %v347 = vmul.f32 %v345, 1.442695
  %v348 = vpow.pop %v347
  %v349 = vmul.f32 %v346, 1.442695
  %v350 = vpow.pop %v349
  %v351 = vsel %vm177, %v348, 0.0
  %352 = vadd.xlane.f32.xlu0 %v351
  %v353 = vpop.xlane.xlu0 %352
  %v354 = vsel %vm177, %v350, 0.0
  %355 = vadd.xlane.f32.xlu0 %v354
  %v356 = vpop.xlane.xlu0 %355
  %v357 = vrcp.pop %v353
  %v358 = vrcp.pop %v356
  %v359 = vmul.f32 %v348, %v357
  %v360 = vmul.f32 %v350, %v358
  %v361 = vpack.c.bf16 %v359, %v359
  %v362 = vpack.c.bf16 %v360, %v360
  %v364 = vunpack.c.l.b16 %v175
  %v365 = vpack.c.b16 %v364, %v364
  %366 = vrot.lane.b32.xlu0 %v365, 120
  %v367 = vpop.permute.xlu0 %366
  %v369 = vsel %vm177, %v361, 0
  %v372 = vsel %vm243, %v367, 0
  %374 = vmatpush.bf16.msra.mxu0 0
  %375 = vmatpush.bf16.msra.mxu0 0
  %376 = vmatpush.bf16.msra.mxu0 0
  %377 = vmatpush.bf16.msra.mxu0 0
  %378 = vmatpush.bf16.msra.mxu0 0
  %379 = vmatpush.bf16.msra.mxu0 0
  %380 = vmatpush.bf16.msra.mxu0 0
  %381 = vmatpush.bf16.msra.mxu0 %v372
  %382 = vmatmul.bf16.gmra.mxu0 %v369
  %v383 = vpop.f32.mrf.mxu0
  %v384 = vadd.f32 0.0, %v383
  %v385 = vpop.f32.mrf.mxu0
  %386 = vdwg.mxu0
  %v388 = vunpack.c.l.b16 %v176
  %v389 = vpack.c.b16 %v388, %v388
  %390 = vrot.lane.b32.xlu0 %v389, 120
  %v391 = vpop.permute.xlu0 %390
  %v393 = vsel %vm177, %v362, 0
  %v396 = vsel %vm243, %v391, 0
  %398 = vmatpush.bf16.msra.mxu0 0
  %399 = vmatpush.bf16.msra.mxu0 0
  %400 = vmatpush.bf16.msra.mxu0 0
  %401 = vmatpush.bf16.msra.mxu0 0
  %402 = vmatpush.bf16.msra.mxu0 0
  %403 = vmatpush.bf16.msra.mxu0 0
  %404 = vmatpush.bf16.msra.mxu0 0
  %405 = vmatpush.bf16.msra.mxu0 %v396
  %406 = vmatmul.bf16.gmra.mxu0 %v393
  %v407 = vpop.f32.mrf.mxu0
  %v408 = vadd.f32 0.0, %v407
  %v409 = vpop.f32.mrf.mxu0
  %410 = vdwg.mxu0
  %413 = vrot.lane.b32.xlu0 %v384, 8
  %v414 = vpop.permute.xlu0 %413
  %415 = vrot.lane.b32.xlu0 %v408, 8
  %v416 = vpop.permute.xlu0 %415
  %vm419 = vcmask 130112
  %420 = vst.msk [vmem:[#allocation2] sm:$0xff] %vm419, %v414
  %421 = vst.msk [vmem:[#allocation2 + $0x8] sm:$0xff] %vm419, %v416
  %422 = vrot.lane.b32.xlu0 %v283, 112
  %v423 = vpop.permute.xlu0 %422
  %424 = vrot.lane.b32.xlu0 %v288, 112
  %v425 = vpop.permute.xlu0 %424
  %v427 = vsel %vm177, %v423, 0
  %v430 = vsel %vm177, %v425, 0
  %432 = vmatpush.bf16.xpose.msra.mxu0 0
  %433 = vmatpush.bf16.xpose.msra.mxu0 0
  %434 = vmatpush.bf16.xpose.msra.mxu0 0
  %435 = vmatpush.bf16.xpose.msra.mxu0 0
  %436 = vmatpush.bf16.xpose.msra.mxu0 0
  %437 = vmatpush.bf16.xpose.msra.mxu0 0
  %438 = vmatpush.bf16.xpose.msra.mxu0 0
  %439 = vmatpush.bf16.xpose.msra.mxu0 %v430
  %440 = vmatmul.bf16.gmra.mxu0 %v427
  %v441 = vpop.f32.mrf.mxu0
  %v442 = vadd.f32 %v169, %v441
  %v443 = vpop.f32.mrf.mxu0
  %444 = vdwg.mxu0
  %445 = vrot.lane.b32.xlu0 %v312, 112
  %v446 = vpop.permute.xlu0 %445
  %447 = vrot.lane.b32.xlu0 %v317, 112
  %v448 = vpop.permute.xlu0 %447
  %v450 = vsel %vm177, %v446, 0
  %v453 = vsel %vm177, %v448, 0
  %455 = vmatpush.bf16.xpose.msra.mxu0 0
  %456 = vmatpush.bf16.xpose.msra.mxu0 0
  %457 = vmatpush.bf16.xpose.msra.mxu0 0
  %458 = vmatpush.bf16.xpose.msra.mxu0 0
  %459 = vmatpush.bf16.xpose.msra.mxu0 0
  %460 = vmatpush.bf16.xpose.msra.mxu0 0
  %461 = vmatpush.bf16.xpose.msra.mxu0 0
  %462 = vmatpush.bf16.xpose.msra.mxu0 %v453
  %463 = vmatmul.bf16.gmra.mxu0 %v450
  %v464 = vpop.f32.mrf.mxu0
  %v465 = vadd.f32 %v170, %v464
  %v466 = vpop.f32.mrf.mxu0
  %467 = vdwg.mxu0
  %v468 = vsel %vm177, %v442, -inf
  %469 = vmax.xlane.f32.xlu0 %v468
  %v470 = vpop.xlane.xlu0 %469
  %v471 = vsel %vm177, %v465, -inf
  %472 = vmax.xlane.f32.xlu0 %v471
  %v473 = vpop.xlane.xlu0 %472
  %v474 = vsub.f32 %v442, %v470
  %v475 = vsub.f32 %v465, %v473
  %v476 = vmul.f32 %v474, 1.442695
  %v477 = vpow.pop %v476
  %v478 = vmul.f32 %v475, 1.442695
  %v479 = vpow.pop %v478
  %v480 = vsel %vm177, %v477, 0.0
  %481 = vadd.xlane.f32.xlu0 %v480
  %v482 = vpop.xlane.xlu0 %481
  %v483 = vsel %vm177, %v479, 0.0
  %484 = vadd.xlane.f32.xlu0 %v483
  %v485 = vpop.xlane.xlu0 %484
  %v486 = vrcp.pop %v482
  %v487 = vrcp.pop %v485
  %v488 = vmul.f32 %v477, %v486
  %v489 = vmul.f32 %v479, %v487
  %v490 = vpack.c.bf16 %v488, %v488
  %v491 = vpack.c.bf16 %v489, %v489
  %492 = vrot.lane.b32.xlu0 %v365, 112
  %v493 = vpop.permute.xlu0 %492
  %v495 = vsel %vm177, %v490, 0
  %v498 = vsel %vm243, %v493, 0
  %500 = vmatpush.bf16.msra.mxu0 0
  %501 = vmatpush.bf16.msra.mxu0 0
  %502 = vmatpush.bf16.msra.mxu0 0
  %503 = vmatpush.bf16.msra.mxu0 0
  %504 = vmatpush.bf16.msra.mxu0 0
  %505 = vmatpush.bf16.msra.mxu0 0
  %506 = vmatpush.bf16.msra.mxu0 0
  %507 = vmatpush.bf16.msra.mxu0 %v498
  %508 = vmatmul.bf16.gmra.mxu0 %v495
  %v509 = vpop.f32.mrf.mxu0
  %v510 = vadd.f32 0.0, %v509
  %v511 = vpop.f32.mrf.mxu0
  %512 = vdwg.mxu0
  %513 = vrot.lane.b32.xlu0 %v389, 112
  %v514 = vpop.permute.xlu0 %513
  %v516 = vsel %vm177, %v491, 0
  %v519 = vsel %vm243, %v514, 0
  %521 = vmatpush.bf16.msra.mxu0 0
  %522 = vmatpush.bf16.msra.mxu0 0
  %523 = vmatpush.bf16.msra.mxu0 0
  %524 = vmatpush.bf16.msra.mxu0 0
  %525 = vmatpush.bf16.msra.mxu0 0
  %526 = vmatpush.bf16.msra.mxu0 0
  %527 = vmatpush.bf16.msra.mxu0 0
  %528 = vmatpush.bf16.msra.mxu0 %v519
  %529 = vmatmul.bf16.gmra.mxu0 %v516
  %v530 = vpop.f32.mrf.mxu0
  %v531 = vadd.f32 0.0, %v530
  %v532 = vpop.f32.mrf.mxu0
  %533 = vdwg.mxu0
  %536 = vrot.lane.b32.xlu0 %v510, 16
  %v537 = vpop.permute.xlu0 %536
  %538 = vrot.lane.b32.xlu0 %v531, 16
  %v539 = vpop.permute.xlu0 %538
  %vm542 = vcmask 195712
  %543 = vst.msk [vmem:[#allocation2] sm:$0xff] %vm542, %v537
  %544 = vst.msk [vmem:[#allocation2 + $0x8] sm:$0xff] %vm542, %v539
  %545 = vrot.lane.b32.xlu0 %v283, 104
  %v546 = vpop.permute.xlu0 %545
  %547 = vrot.lane.b32.xlu0 %v288, 104
  %v548 = vpop.permute.xlu0 %547
  %v550 = vsel %vm177, %v546, 0
  %v553 = vsel %vm177, %v548, 0
  %555 = vmatpush.bf16.xpose.msra.mxu0 0
  %556 = vmatpush.bf16.xpose.msra.mxu0 0
  %557 = vmatpush.bf16.xpose.msra.mxu0 0
  %558 = vmatpush.bf16.xpose.msra.mxu0 0
  %559 = vmatpush.bf16.xpose.msra.mxu0 0
  %560 = vmatpush.bf16.xpose.msra.mxu0 0
  %561 = vmatpush.bf16.xpose.msra.mxu0 0
  %562 = vmatpush.bf16.xpose.msra.mxu0 %v553
  %563 = vmatmul.bf16.gmra.mxu0 %v550
  %v564 = vpop.f32.mrf.mxu0
  %v565 = vadd.f32 %v169, %v564
  %v566 = vpop.f32.mrf.mxu0
  %567 = vdwg.mxu0
  %568 = vrot.lane.b32.xlu0 %v312, 104
  %v569 = vpop.permute.xlu0 %568
  %570 = vrot.lane.b32.xlu0 %v317, 104
  %v571 = vpop.permute.xlu0 %570
  %v573 = vsel %vm177, %v569, 0
  %v576 = vsel %vm177, %v571, 0
  %578 = vmatpush.bf16.xpose.msra.mxu0 0
  %579 = vmatpush.bf16.xpose.msra.mxu0 0
  %580 = vmatpush.bf16.xpose.msra.mxu0 0
  %581 = vmatpush.bf16.xpose.msra.mxu0 0
  %582 = vmatpush.bf16.xpose.msra.mxu0 0
  %583 = vmatpush.bf16.xpose.msra.mxu0 0
  %584 = vmatpush.bf16.xpose.msra.mxu0 0
  %585 = vmatpush.bf16.xpose.msra.mxu0 %v576
  %586 = vmatmul.bf16.gmra.mxu0 %v573
  %v587 = vpop.f32.mrf.mxu0
  %v588 = vadd.f32 %v170, %v587
  %v589 = vpop.f32.mrf.mxu0
  %590 = vdwg.mxu0
  %v591 = vsel %vm177, %v565, -inf
  %592 = vmax.xlane.f32.xlu0 %v591
  %v593 = vpop.xlane.xlu0 %592
  %v594 = vsel %vm177, %v588, -inf
  %595 = vmax.xlane.f32.xlu0 %v594
  %v596 = vpop.xlane.xlu0 %595
  %v597 = vsub.f32 %v565, %v593
  %v598 = vsub.f32 %v588, %v596
  %v599 = vmul.f32 %v597, 1.442695
  %v600 = vpow.pop %v599
  %v601 = vmul.f32 %v598, 1.442695
  %v602 = vpow.pop %v601
  %v603 = vsel %vm177, %v600, 0.0
  %604 = vadd.xlane.f32.xlu0 %v603
  %v605 = vpop.xlane.xlu0 %604
  %v606 = vsel %vm177, %v602, 0.0
  %607 = vadd.xlane.f32.xlu0 %v606
  %v608 = vpop.xlane.xlu0 %607
  %v609 = vrcp.pop %v605
  %v610 = vrcp.pop %v608
  %v611 = vmul.f32 %v600, %v609
  %v612 = vmul.f32 %v602, %v610
  %v613 = vpack.c.bf16 %v611, %v611
  %v614 = vpack.c.bf16 %v612, %v612
  %615 = vrot.lane.b32.xlu0 %v365, 104
  %v616 = vpop.permute.xlu0 %615
  %v618 = vsel %vm177, %v613, 0
  %v621 = vsel %vm243, %v616, 0
  %623 = vmatpush.bf16.msra.mxu0 0
  %624 = vmatpush.bf16.msra.mxu0 0
  %625 = vmatpush.bf16.msra.mxu0 0
  %626 = vmatpush.bf16.msra.mxu0 0
  %627 = vmatpush.bf16.msra.mxu0 0
  %628 = vmatpush.bf16.msra.mxu0 0
  %629 = vmatpush.bf16.msra.mxu0 0
  %630 = vmatpush.bf16.msra.mxu0 %v621
  %631 = vmatmul.bf16.gmra.mxu0 %v618
  %v632 = vpop.f32.mrf.mxu0
  %v633 = vadd.f32 0.0, %v632
  %v634 = vpop.f32.mrf.mxu0
  %635 = vdwg.mxu0
  %636 = vrot.lane.b32.xlu0 %v389, 104
  %v637 = vpop.permute.xlu0 %636
  %v639 = vsel %vm177, %v614, 0
  %v642 = vsel %vm243, %v637, 0
  %644 = vmatpush.bf16.msra.mxu0 0
  %645 = vmatpush.bf16.msra.mxu0 0
  %646 = vmatpush.bf16.msra.mxu0 0
  %647 = vmatpush.bf16.msra.mxu0 0
  %648 = vmatpush.bf16.msra.mxu0 0
  %649 = vmatpush.bf16.msra.mxu0 0
  %650 = vmatpush.bf16.msra.mxu0 0
  %651 = vmatpush.bf16.msra.mxu0 %v642
  %652 = vmatmul.bf16.gmra.mxu0 %v639
  %v653 = vpop.f32.mrf.mxu0
  %v654 = vadd.f32 0.0, %v653
  %v655 = vpop.f32.mrf.mxu0
  %656 = vdwg.mxu0
  %659 = vrot.lane.b32.xlu0 %v633, 24
  %v660 = vpop.permute.xlu0 %659
  %661 = vrot.lane.b32.xlu0 %v654, 24
  %v662 = vpop.permute.xlu0 %661
  %vm665 = vcmask 261312
  %666 = vst.msk [vmem:[#allocation2] sm:$0xff] %vm665, %v660
  %667 = vst.msk [vmem:[#allocation2 + $0x8] sm:$0xff] %vm665, %v662
  %v668 = vld [vmem:[#allocation2] sm:$0xff]
  %v669 = vld [vmem:[#allocation2 + $0x8] sm:$0xff]
  %v670 = vpack.c.bf16 %v669, %v668
  %v671 = vld [vmem:[%s8] sm:$0xf]
  %v672 = vld [vmem:[%s8 + $0x4] sm:$0xf]
  %v673 = vld [vmem:[%s8 + $0x8] sm:$0xf]
  %v674 = vld [vmem:[%s8 + $0xc] sm:$0xf]
  %v675 = vld [vmem:[%s9] sm:$0x1]
  %v677 = vperm.slane %v675, 0
  %v683 = vunpack.c.l.b16 %v671
  %v684 = vunpack.c.l.b16 %v672
  %v685 = vunpack.c.l.b16 %v673
  %v686 = vunpack.c.l.b16 %v674
  %v687 = vpack.c.b16 %v684, %v683
  %v688 = vpack.c.b16 %v686, %v685
  %v692 = vsel %vm83, %v670, 0
  %694 = vmatpush.bf16.msra.mxu0 0
  %695 = vmatpush.bf16.msra.mxu0 0
  %696 = vmatpush.bf16.msra.mxu0 0
  %697 = vmatpush.bf16.msra.mxu0 0
  %698 = vmatpush.bf16.msra.mxu0 0
  %699 = vmatpush.bf16.msra.mxu0 0
  %700 = vmatpush.bf16.msra.mxu0 %v688
  %701 = vmatpush.bf16.msra.mxu0 %v687
  %702 = vmatmul.bf16.gmra.mxu0 %v692
  %v703 = vpop.f32.mrf.mxu0
  %v704 = vadd.f32 %v677, %v703
  %v705 = vpop.f32.mrf.mxu0
  %v706 = vadd.f32 %v677, %v705
  %707 = vdwg.mxu0
  %v708 = vadd.f32 %v60, %v704
  %v709 = vadd.f32 %v61, %v706
  %v710 = vld [vmem:[%s10] sm:$0x1]
  %v711 = vld [vmem:[%s11] sm:$0x1]
  %v712 = vsel %vm83, %v708, 0.0
  %713 = vadd.xlane.f32.xlu0 %v712
  %v714 = vpop.xlane.xlu0 %713
  %v715 = vsel %vm83, %v709, 0.0
  %716 = vadd.xlane.f32.xlu0 %v715
  %v717 = vpop.xlane.xlu0 %716
  %v718 = vrcp.pop 32.0
  %v719 = vmul.f32 32.0, %v718
  %v720 = vsub.f32 1.0, %v719
  %v721 = vmul.f32 %v718, %v720
  %v722 = vadd.f32 %v718, %v721
  %vm723 = vweird.f32 %v718
  %v724 = vsel %vm723, %v718, %v722
  %v725 = vmul.f32 %v714, %v724
  %v726 = vmul.f32 %v717, %v724
  %v727 = vsub.f32 %v708, %v725
  %v728 = vsub.f32 %v709, %v726
  %v729 = vmul.f32 %v727, %v727
  %v730 = vmul.f32 %v728, %v728
  %v731 = vsel %vm83, %v729, 0.0
  %732 = vadd.xlane.f32.xlu0 %v731
  %v733 = vpop.xlane.xlu0 %732
  %v734 = vsel %vm83, %v730, 0.0
  %735 = vadd.xlane.f32.xlu0 %v734
  %v736 = vpop.xlane.xlu0 %735
  %v737 = vmul.f32 %v733, %v724
  %v738 = vmul.f32 %v736, %v724
  %v739 = vadd.f32 %v737, 1e-05
  %v740 = vadd.f32 %v738, 1e-05
  %v741 = vrsqrt.pop %v739
  %v742 = vmul.f32 %v741, %v739
  %v743 = vmul.f32 %v742, %v741
  %v744 = vmul.f32 0.5, %v743
  %v745 = vsub.f32 1.5, %v744
  %v746 = vmul.f32 %v741, %v745
  %vm747 = vweird.f32 %v739
  %vm748 = vweird.f32 %v741
  %vm749 = vmor %vm747, %vm748
  %v750 = vsel %vm749, %v741, %v746
  %v751 = vrsqrt.pop %v740
  %v752 = vmul.f32 %v751, %v740
  %v753 = vmul.f32 %v752, %v751
  %v754 = vmul.f32 0.5, %v753
  %v755 = vsub.f32 1.5, %v754
  %v756 = vmul.f32 %v751, %v755
  %vm757 = vweird.f32 %v740
  %vm758 = vweird.f32 %v751
  %vm759 = vmor %vm757, %vm758
  %v760 = vsel %vm759, %v751, %v756
  %v761 = vmul.f32 %v727, %v750
  %v762 = vmul.f32 %v728, %v760
  %v764 = vperm.slane %v710, 0
  %v766 = vmul.f32 %v761, %v764
  %v767 = vmul.f32 %v762, %v764
  %v769 = vperm.slane %v711, 0
  %v771 = vadd.f32 %v766, %v769
  %v772 = vadd.f32 %v767, %v769
  %v773 = vpack.c.bf16 %v772, %v771
  %v774 = vld [vmem:[%s12] sm:$0xf]
  %v775 = vld [vmem:[%s12 + $0x4] sm:$0xf]
  %v776 = vld [vmem:[%s12 + $0x8] sm:$0xf]
  %v777 = vld [vmem:[%s12 + $0xc] sm:$0xf]
  %v778 = vld [vmem:[%s13] sm:$0x1]
  %v780 = vperm.slane %v778, 0
  %v786 = vunpack.c.l.b16 %v774
  %v787 = vunpack.c.l.b16 %v775
  %v788 = vunpack.c.l.b16 %v776
  %v789 = vunpack.c.l.b16 %v777
  %v790 = vpack.c.b16 %v787, %v786
  %v791 = vpack.c.b16 %v789, %v788
  %v795 = vsel %vm83, %v773, 0
  %797 = vmatpush.bf16.msra.mxu0 0
  %798 = vmatpush.bf16.msra.mxu0 0
  %799 = vmatpush.bf16.msra.mxu0 0
  %800 = vmatpush.bf16.msra.mxu0 0
  %801 = vmatpush.bf16.msra.mxu0 0
  %802 = vmatpush.bf16.msra.mxu0 0
  %803 = vmatpush.bf16.msra.mxu0 %v791
  %804 = vmatpush.bf16.msra.mxu0 %v790
  %805 = vmatmul.bf16.gmra.mxu0 %v795
  %v806 = vpop.f32.mrf.mxu0
  %v807 = vadd.f32 %v780, %v806
  %v808 = vpop.f32.mrf.mxu0
  %v809 = vadd.f32 %v780, %v808
  %810 = vdwg.mxu0
  %v811 = vmax.f32 %v807, 0.0
  %v812 = vmax.f32 %v809, 0.0
  %v813 = vpack.c.bf16 %v812, %v811
  %v814 = vld [vmem:[%s14] sm:$0xf]
  %v815 = vld [vmem:[%s14 + $0x4] sm:$0xf]
  %v816 = vld [vmem:[%s14 + $0x8] sm:$0xf]
  %v817 = vld [vmem:[%s14 + $0xc] sm:$0xf]
  %v818 = vld [vmem:[%s14 + $0x10] sm:$0xf]
  %v819 = vld [vmem:[%s14 + $0x14] sm:$0xf]
  %v820 = vld [vmem:[%s14 + $0x18] sm:$0xf]
  %v821 = vld [vmem:[%s14 + $0x1c] sm:$0xf]
  %v822 = vld [vmem:[%s15] sm:$0x1]
  %v824 = vperm.slane %v822, 0
  %v834 = vunpack.c.l.b16 %v814
  %v835 = vunpack.c.l.b16 %v815
  %v836 = vunpack.c.l.b16 %v816
  %v837 = vunpack.c.l.b16 %v817
  %v838 = vunpack.c.l.b16 %v818
  %v839 = vunpack.c.l.b16 %v819
  %v840 = vunpack.c.l.b16 %v820
  %v841 = vunpack.c.l.b16 %v821
  %v842 = vpack.c.b16 %v835, %v834
  %v843 = vpack.c.b16 %v837, %v836
  %v844 = vpack.c.b16 %v839, %v838
  %v845 = vpack.c.b16 %v841, %v840
  %vm850 = vcmask 523264
  %v852 = vsel %vm850, %v813, 0
  %854 = vmatpush.bf16.msra.mxu0 0
  %855 = vmatpush.bf16.msra.mxu0 0
  %856 = vmatpush.bf16.msra.mxu0 0
  %857 = vmatpush.bf16.msra.mxu0 0
  %858 = vmatpush.bf16.msra.mxu0 %v845
  %859 = vmatpush.bf16.msra.mxu0 %v844
  %860 = vmatpush.bf16.msra.mxu0 %v843
  %861 = vmatpush.bf16.msra.mxu0 %v842
  %862 = vmatmul.bf16.gmra.mxu0 %v852
  %v863 = vpop.f32.mrf.mxu0
  %v864 = vadd.f32 %v824, %v863
  %v865 = vpop.f32.mrf.mxu0
  %v866 = vadd.f32 %v824, %v865
  %867 = vdwg.mxu0
  %v868 = vadd.f32 %v771, %v864
  %v869 = vadd.f32 %v772, %v866
  %v870 = vld [vmem:[%s16] sm:$0x1]
  %v871 = vld [vmem:[%s17] sm:$0x1]
  %v872 = vsel %vm83, %v868, 0.0
  %873 = vadd.xlane.f32.xlu0 %v872
  %v874 = vpop.xlane.xlu0 %873
  %v875 = vsel %vm83, %v869, 0.0
  %876 = vadd.xlane.f32.xlu0 %v875
  %v877 = vpop.xlane.xlu0 %876
  %v878 = vmul.f32 %v874, %v724
  %v879 = vmul.f32 %v877, %v724
  %v880 = vsub.f32 %v868, %v878
  %v881 = vsub.f32 %v869, %v879
  %v882 = vmul.f32 %v880, %v880
  %v883 = vmul.f32 %v881, %v881
  %v884 = vsel %vm83, %v882, 0.0
  %885 = vadd.xlane.f32.xlu0 %v884
  %v886 = vpop.xlane.xlu0 %885
  %v887 = vsel %vm83, %v883, 0.0
  %888 = vadd.xlane.f32.xlu0 %v887
  %v889 = vpop.xlane.xlu0 %888
  %v890 = vmul.f32 %v886, %v724
  %v891 = vmul.f32 %v889, %v724
  %v892 = vadd.f32 %v890, 1e-05
  %v893 = vadd.f32 %v891, 1e-05
  %v894 = vrsqrt.pop %v892
  %v895 = vmul.f32 %v894, %v892
  %v896 = vmul.f32 %v895, %v894
  %v897 = vmul.f32 0.5, %v896
  %v898 = vsub.f32 1.5, %v897
  %v899 = vmul.f32 %v894, %v898
  %vm900 = vweird.f32 %v892
  %vm901 = vweird.f32 %v894
  %vm902 = vmor %vm900, %vm901
  %v903 = vsel %vm902, %v894, %v899
  %v904 = vrsqrt.pop %v893
  %v905 = vmul.f32 %v904, %v893
  %v906 = vmul.f32 %v905, %v904
  %v907 = vmul.f32 0.5, %v906
  %v908 = vsub.f32 1.5, %v907
  %v909 = vmul.f32 %v904, %v908
  %vm910 = vweird.f32 %v893
  %vm911 = vweird.f32 %v904
  %vm912 = vmor %vm910, %vm911
  %v913 = vsel %vm912, %v904, %v909
  %v914 = vmul.f32 %v880, %v903
  %v915 = vmul.f32 %v881, %v913
  %v917 = vperm.slane %v870, 0
  %v919 = vmul.f32 %v914, %v917
  %v920 = vmul.f32 %v915, %v917
  %v922 = vperm.slane %v871, 0
  %v924 = vadd.f32 %v919, %v922
  %v925 = vadd.f32 %v920, %v922
  %926 = vst.msk [vmem:[%s18] sm:$0xff] %vm83, %v924
  %927 = vst.msk [vmem:[%s18 + $0x8] sm:$0xff] %vm83, %v925
  // Predicated region
  $region74: #{multi_level_encoder.2} parent=0 // pred_check
    _
  $region75: #{multi_level_encoder.2} parent=0 // pred_check_branch
    %929 = sbr.rel (0) target = $region77
  $region76: #{multi_level_encoder.2} parent=0 // pred_region
    _
  $region77: #{multi_level_encoder.2} parent=0 // pred_fallthru
    _
  // Predicated region
  $region78: #{multi_level_encoder.2} parent=0 // pred_check
    _
  $region79: #{multi_level_encoder.2} parent=0 // pred_check_branch
    %931 = sbr.rel (0) target = $region81
  $region80: #{multi_level_encoder.2} parent=0 // pred_region
    _
  $region81: #{multi_level_encoder.2} parent=0 // pred_fallthru
    _

</llo_original>
